<compile_context>
chip_gen: v7x
topology: tpu7x:2x2x1
jax: 0.10.0
libtpu: 0.0.40
codegen_flags: <defaults>
</compile_context>

<pallas_src>
import functools

import jax
import jax.numpy as jnp
from jax import lax
from jax.experimental import pallas as pl
from jax.experimental.pallas import tpu as pltpu


# ----------------------------------------------------------------------------
# Fused kernel (imgs_per_block images per grid step, lane-dense layout)
# ----------------------------------------------------------------------------

def _fused_kernel(x_ref, bexp_ref, b1_ref, wdw_ref, b2_ref, bproj_ref, b3_ref,
                  o_ref, *, img_h, width, c_exp):
    # x_ref:    (rows, W*Cin)       rows = imgs_per_block * H, f32
    # bexp_ref: (W*Cin, W*Cexp)     block-diag 1x1 expand weight, s1 folded, bf16
    # b*_ref:   (1, W*C)            folded-BN biases, pre-tiled per lane, f32
    # wdw_ref:  (9, W*Cexp)         3x3 dw weight, s2 folded, tiled, border-masked
    # bproj_ref:(W*Cexp, W*Cout)    block-diag 1x1 project weight, s3 folded, bf16
    # o_ref:    (rows, W*Cout)
    rows = x_ref.shape[0]
    wc = width * c_exp

    x = x_ref[...]                                            # f32 (residual)

    # --- 1x1 expand conv (block-diag matmul, bf16 MXU, f32 acc) + bias + ReLU6
    h1 = jnp.dot(x.astype(jnp.bfloat16), bexp_ref[...],
                 preferred_element_type=jnp.float32)
    h1 = jnp.clip(h1 + b1_ref[...], 0.0, 6.0)                 # (rows, W*Cexp)

    # --- 3x3 depthwise conv, stride 1, SAME (per-image row masks + lane rolls)
    row = lax.broadcasted_iota(jnp.int32, (rows, 1), 0) % img_h
    r_up = jnp.where(row == 0, 0.0,
                     pltpu.roll(h1, shift=1, axis=0))             # h-1 tap
    r_dn = jnp.where(row == img_h - 1, 0.0,
                     pltpu.roll(h1, shift=rows - 1, axis=0))      # h+1 tap
    ky_rows = (r_up, h1, r_dn)                                    # ky = 0,1,2

    wdw = wdw_ref[...]                                            # (9, W*Cexp)
    acc = jnp.zeros_like(h1)
    for ky in range(3):
        r = ky_rows[ky]
        for kx in range(3):
            if kx == 0:                 # w-1 (lane wrap zeroed via weight mask)
                t = pltpu.roll(r, shift=c_exp, axis=1)
            elif kx == 2:               # w+1
                t = pltpu.roll(r, shift=wc - c_exp, axis=1)
            else:
                t = r
            k = 3 * ky + kx
            acc = acc + t * wdw[k:k + 1, :]
    h2 = jnp.clip(acc + b2_ref[...], 0.0, 6.0)

    # --- 1x1 project conv (bf16 MXU, f32 acc) + bias + residual add ---------
    y = jnp.dot(h2.astype(jnp.bfloat16), bproj_ref[...],
                preferred_element_type=jnp.float32)
    o_ref[...] = y + b3_ref[...] + x                          # Cin == Cout


# ----------------------------------------------------------------------------
# Parameter setup (deterministic), BN folding, kernel-operand packing
# ----------------------------------------------------------------------------

def fold_bn(gamma, beta, mean, var, eps=1e-5):
    scale = gamma / jnp.sqrt(var + eps)
    bias = beta - mean * scale
    return scale, bias                                   # (C,) each


def make_params(key, c_in, c_out, expand_ratio):
    c_exp = int(round(c_in * expand_ratio))
    ks = jax.random.split(key, 6)

    def bn(k, c):
        k1, k2, k3, k4 = jax.random.split(k, 4)
        gamma = 1.0 + 0.1 * jax.random.normal(k1, (c,), jnp.float32)
        beta = 0.1 * jax.random.normal(k2, (c,), jnp.float32)
        mean = 0.1 * jax.random.normal(k3, (c,), jnp.float32)
        var = jax.random.uniform(k4, (c,), jnp.float32, 0.5, 1.5)
        return fold_bn(gamma, beta, mean, var)

    params = {
        "w_exp": 0.1 * jax.random.normal(ks[0], (c_in, c_exp), jnp.float32),
        "w_dw": 0.1 * jax.random.normal(ks[1], (3, 3, c_exp), jnp.float32),
        "w_proj": 0.1 * jax.random.normal(ks[2], (c_exp, c_out), jnp.float32),
    }
    params["bn1_scale"], params["bn1_bias"] = bn(ks[3], c_exp)
    params["bn2_scale"], params["bn2_bias"] = bn(ks[4], c_exp)
    params["bn3_scale"], params["bn3_bias"] = bn(ks[5], c_out)
    return params, c_exp


def _block_diag(w_mat, width):
    # (Ci, Co) 1x1-conv weight -> (width*Ci, width*Co) block-diagonal matrix.
    eye = jnp.eye(width, dtype=w_mat.dtype)
    ci, co = w_mat.shape
    return jnp.einsum("uv,ij->uivj", eye, w_mat).reshape(width * ci, width * co)


def pack_params(params, width):
    """Precompute lane-dense kernel operands once (BN scales folded in)."""
    c_in, c_exp = params["w_exp"].shape
    c_out = params["w_proj"].shape[1]

    def tile_c(v):                       # (C,) -> (1, width*C), value per lane
        return jnp.tile(v, width)[None, :]

    # Fold BN scales into the conv weights (keeps only bias adds in-kernel).
    w_exp_f = params["w_exp"] * params["bn1_scale"][None, :]       # (Cin, Cexp)
    w_dw_f = params["w_dw"] * params["bn2_scale"][None, None, :]   # (3,3,Cexp)
    w_proj_f = params["w_proj"] * params["bn3_scale"][None, :]     # (Cexp, Cout)

    # Depthwise weight: (3,3,C) -> (9, W*C), with the w-border taps zeroed so
    # the lane-roll wraparound contributes nothing (SAME padding in W).
    wdw = w_dw_f.reshape(9, c_exp)
    wdw_t = jnp.tile(wdw, (1, width))                              # (9, W*Cexp)
    lane_w = jnp.arange(width * c_exp) // c_exp
    kx_idx = jnp.arange(9) % 3
    mask = jnp.ones((9, width * c_exp), jnp.float32)
    mask = jnp.where((kx_idx[:, None] == 0) & (lane_w[None, :] == 0), 0.0, mask)
    mask = jnp.where((kx_idx[:, None] == 2) & (lane_w[None, :] == width - 1),
                     0.0, mask)
    wdw_t = wdw_t * mask

    bexp = _block_diag(w_exp_f, width).astype(jnp.bfloat16)
    bproj = _block_diag(w_proj_f, width).astype(jnp.bfloat16)

    # VMEM sanity for the O(W^2*C^2) block-diag weights (see TODO at top).
    blockdiag_bytes = (bexp.size + bproj.size) * 2
    assert blockdiag_bytes < 8 * 1024 * 1024, (
        "block-diag 1x1 weights too large for VMEM; tile W instead")

    return {
        "bexp": bexp, "b1": tile_c(params["bn1_bias"]),
        "wdw": wdw_t, "b2": tile_c(params["bn2_bias"]),
        "bproj": bproj, "b3": tile_c(params["bn3_bias"]),
    }


# ----------------------------------------------------------------------------
# Wrappers
# ----------------------------------------------------------------------------

def _pick_imgs_per_block(n, img_h, target_rows=256):
    """Largest divisor of n with rows<=target, keeping >=2 grid steps if n>=2."""
    best = 1
    for ipb in range(1, n + 1):
        if n % ipb != 0:
            continue
        if ipb * img_h > target_rows:
            continue
        if n >= 2 and (n // ipb) < 2:
            continue                      # keep both TensorCores busy on v7x
        best = ipb
    return best


def inverted_residual_lane_dense(x_ld, packed, *, n, img_h, width):
    """x_ld: (N*H, W*Cin) f32 lane-dense activations. Returns (N*H, W*Cout)."""
    wc_in = x_ld.shape[1]
    wc_exp = packed["bexp"].shape[1]
    wc_out = packed["bproj"].shape[1]
    c_exp = wc_exp // width

    imgs_per_block = _pick_imgs_per_block(n, img_h)
    rows = imgs_per_block * img_h                         # multiple of 8 (H=16)
    grid = n // imgs_per_block

    kernel = functools.partial(_fused_kernel, img_h=img_h, width=width,
                               c_exp=c_exp)

    return pl.pallas_call(
        kernel,
        out_shape=jax.ShapeDtypeStruct((n * img_h, wc_out), jnp.float32),
        grid_spec=pltpu.PrefetchScalarGridSpec(
            num_scalar_prefetch=0,
            grid=(grid,),                          # imgs_per_block images/step
            in_specs=[
                pl.BlockSpec((rows, wc_in), lambda i: (i, 0)),       # x
                pl.BlockSpec((wc_in, wc_exp), lambda i: (0, 0)),     # Bexp
                pl.BlockSpec((1, wc_exp), lambda i: (0, 0)),         # b1
                pl.BlockSpec((9, wc_exp), lambda i: (0, 0)),         # wdw
                pl.BlockSpec((1, wc_exp), lambda i: (0, 0)),         # b2
                pl.BlockSpec((wc_exp, wc_out), lambda i: (0, 0)),    # Bproj
                pl.BlockSpec((1, wc_out), lambda i: (0, 0)),         # b3
            ],
            out_specs=pl.BlockSpec((rows, wc_out), lambda i: (i, 0)),
        ),
        compiler_params=pltpu.CompilerParams(
            dimension_semantics=("parallel",)),           # 2 TCs on v7x
    )(x_ld, packed["bexp"], packed["b1"], packed["wdw"], packed["b2"],
      packed["bproj"], packed["b3"])


def inverted_residual(x_nchw, packed):
    """x_nchw: (N, Cin, H, W) float32. Returns (N, Cout, H, W)."""
    n, c_in, hh, ww = x_nchw.shape
    c_out = packed["bproj"].shape[1] // ww

    # NCHW -> channels-last lane-dense (N*H, W*C) glue.  TODO(synk): avoid
    # these HBM transposes when chaining blocks (use the lane-dense entry).
    x_ld = jnp.transpose(x_nchw, (0, 2, 3, 1)).reshape(n * hh, ww * c_in)
    out = inverted_residual_lane_dense(x_ld, packed, n=n, img_h=hh, width=ww)
    return jnp.transpose(out.reshape(n, hh, ww, c_out), (0, 3, 1, 2))


# ----------------------------------------------------------------------------
# Pure-JAX reference (for verification only)
# ----------------------------------------------------------------------------

def reference(x_nchw, params):
    n, c_in, hh, ww = x_nchw.shape
    c_exp = params["w_exp"].shape[1]
    c_out = params["w_proj"].shape[1]
    x = jnp.transpose(x_nchw, (0, 2, 3, 1))
    dn = ("NHWC", "HWIO", "NHWC")

    y = lax.conv_general_dilated(x, params["w_exp"].reshape(1, 1, c_in, c_exp),
                                 (1, 1), "VALID", dimension_numbers=dn)
    y = jnp.clip(y * params["bn1_scale"] + params["bn1_bias"], 0.0, 6.0)

    y = lax.conv_general_dilated(y, params["w_dw"].reshape(3, 3, 1, c_exp),
                                 (1, 1), "SAME", dimension_numbers=dn,
                                 feature_group_count=c_exp)
    y = jnp.clip(y * params["bn2_scale"] + params["bn2_bias"], 0.0, 6.0)

    y = lax.conv_general_dilated(y, params["w_proj"].reshape(1, 1, c_exp, c_out),
                                 (1, 1), "VALID", dimension_numbers=dn)
    y = y * params["bn3_scale"] + params["bn3_bias"]
    y = y + x
    return jnp.transpose(y, (0, 3, 1, 2))


# ----------------------------------------------------------------------------

if __name__ == "__main__":
    key = jax.random.PRNGKey(0)
    k_x, k_p = jax.random.split(key)

    N, C_IN, H, W = 4, 8, 16, 16
    C_OUT, STRIDE, EXPAND = 8, 1, 4          # -> use_res_connect = True

    x = jax.random.normal(k_x, (N, C_IN, H, W), jnp.float32)
    params, c_exp = make_params(k_p, C_IN, C_OUT, EXPAND)
    packed = pack_params(params, W)          # one-time lane-dense packing

    out = jax.jit(inverted_residual)(x, packed)
    out = jax.block_until_ready(out)

    ref = reference(x, params)
    assert out.shape == (N, C_OUT, H, W)
    # bf16 MXU operands -> slightly looser tolerance than the f32-only version.
    assert jnp.allclose(out, ref, atol=2e-2, rtol=2e-2), "mismatch vs reference"

    print("KERNEL_OK")
</pallas_src>

<mosaic_0001>
module attributes {stable_mosaic.version = 11 : i64} {
  func.func @_fused_kernel(%arg0: i32, %arg1: memref<32x128xf32, #tpu.memory_space<vmem>>, %arg2: memref<128x512xbf16, #tpu.memory_space<vmem>>, %arg3: memref<1x512xf32, #tpu.memory_space<vmem>>, %arg4: memref<9x512xf32, #tpu.memory_space<vmem>>, %arg5: memref<1x512xf32, #tpu.memory_space<vmem>>, %arg6: memref<512x128xbf16, #tpu.memory_space<vmem>>, %arg7: memref<1x128xf32, #tpu.memory_space<vmem>>, %arg8: memref<32x128xf32, #tpu.memory_space<vmem>>) attributes {dimension_semantics = [#tpu.dimension_semantics<parallel>], iteration_bounds = array<i64: 2>, scalar_prefetch = 0 : i64, scratch_operands = 0 : i64, tpu.core_type = #tpu.core_type<tc>, window_params = [{transform_indices = @transform_0, window_bounds = array<i64: 32, 128>}, {pipeline_mode = #tpu.pipeline_mode<synchronous>, transform_indices = @transform_1, window_bounds = array<i64: 128, 512>}, {pipeline_mode = #tpu.pipeline_mode<synchronous>, transform_indices = @transform_2, window_bounds = array<i64: 1, 512>}, {pipeline_mode = #tpu.pipeline_mode<synchronous>, transform_indices = @transform_3, window_bounds = array<i64: 9, 512>}, {pipeline_mode = #tpu.pipeline_mode<synchronous>, transform_indices = @transform_4, window_bounds = array<i64: 1, 512>}, {pipeline_mode = #tpu.pipeline_mode<synchronous>, transform_indices = @transform_5, window_bounds = array<i64: 512, 128>}, {pipeline_mode = #tpu.pipeline_mode<synchronous>, transform_indices = @transform_6, window_bounds = array<i64: 1, 128>}, {transform_indices = @transform_7, window_bounds = array<i64: 32, 128>}]} {
    %c0 = arith.constant 0 : index
    %c0_0 = arith.constant 0 : index
    %0 = vector.load %arg1[%c0, %c0_0] : memref<32x128xf32, #tpu.memory_space<vmem>>, vector<32x128xf32>
    %1 = arith.truncf %0 : vector<32x128xf32> to vector<32x128xbf16>
    %c0_1 = arith.constant 0 : index
    %c0_2 = arith.constant 0 : index
    %2 = vector.load %arg2[%c0_1, %c0_2] : memref<128x512xbf16, #tpu.memory_space<vmem>>, vector<128x512xbf16>
    %cst = arith.constant dense<0.000000e+00> : vector<32x512xf32>
    %3 = tpu.matmul %1, %2, %cst {dimension_numbers = #tpu.dot_dimension_numbers<[1], [0], [0], [1], [0, 0, 1, 1], [], []>} : vector<32x128xbf16>, vector<128x512xbf16>, vector<32x512xf32> -> vector<32x512xf32>
    %c0_3 = arith.constant 0 : index
    %c0_4 = arith.constant 0 : index
    %4 = vector.load %arg3[%c0_3, %c0_4] : memref<1x512xf32, #tpu.memory_space<vmem>>, vector<1x512xf32>
    %5 = vector.broadcast %4 : vector<1x512xf32> to vector<32x512xf32>
    %6 = arith.addf %3, %5 : vector<32x512xf32>
    %cst_5 = arith.constant 0.000000e+00 : f32
    %cst_6 = arith.constant 6.000000e+00 : f32
    %7 = vector.broadcast %cst_5 : f32 to vector<32x512xf32>
    %8 = arith.maximumf %7, %6 : vector<32x512xf32>
    %9 = vector.broadcast %cst_6 : f32 to vector<32x512xf32>
    %10 = arith.minimumf %9, %8 : vector<32x512xf32>
    %11 = tpu.iota {dimensions = array<i32: 0>} : vector<32x1xi32>
    %c16_i32 = arith.constant 16 : i32
    %c0_i32 = arith.constant 0 : i32
    %12 = arith.cmpi eq, %c16_i32, %c0_i32 : i32
    %c1_i32 = arith.constant 1 : i32
    %13 = arith.select %12, %c1_i32, %c16_i32 : i32
    %14 = vector.broadcast %13 : i32 to vector<32x1xi32>
    %15 = arith.remsi %11, %14 : vector<32x1xi32>
    %c0_i32_7 = arith.constant 0 : i32
    %16 = vector.broadcast %c0_i32_7 : i32 to vector<32x1xi32>
    %17 = arith.cmpi ne, %15, %16 : vector<32x1xi32>
    %c0_i32_8 = arith.constant 0 : i32
    %18 = vector.broadcast %c0_i32_8 : i32 to vector<32x1xi32>
    %19 = arith.cmpi slt, %15, %18 : vector<32x1xi32>
    %c0_i32_9 = arith.constant 0 : i32
    %20 = arith.cmpi slt, %13, %c0_i32_9 : i32
    %21 = vector.broadcast %20 : i1 to vector<32x1xi1>
    %22 = vector.broadcast %21 : vector<32x1xi1> to vector<32x1xi1>
    %23 = arith.xori %19, %22 : vector<32x1xi1>
    %24 = arith.andi %23, %17 : vector<32x1xi1>
    %25 = vector.broadcast %13 : i32 to vector<32x1xi32>
    %26 = arith.addi %15, %25 : vector<32x1xi32>
    %27 = arith.select %24, %26, %15 : vector<32x1xi1>, vector<32x1xi32>
    %c0_i32_10 = arith.constant 0 : i32
    %28 = vector.broadcast %c0_i32_10 : i32 to vector<32x1xi32>
    %29 = arith.cmpi eq, %27, %28 : vector<32x1xi32>
    %c1_i32_11 = arith.constant 1 : i32
    %30 = tpu.dynamic_rotate %10 by %c1_i32_11 dim 0 : vector<32x512xf32>, i32 -> vector<32x512xf32>
    %cst_12 = arith.constant 0.000000e+00 : f32
    %31 = vector.shape_cast %29 : vector<32x1xi1> to vector<32x1xi1>
    %32 = vector.broadcast %31 : vector<32x1xi1> to vector<32x512xi1>
    %33 = vector.broadcast %cst_12 : f32 to vector<32x512xf32>
    %34 = arith.select %32, %33, %30 : vector<32x512xi1>, vector<32x512xf32>
    %c15_i32 = arith.constant 15 : i32
    %35 = vector.broadcast %c15_i32 : i32 to vector<32x1xi32>
    %36 = arith.cmpi eq, %27, %35 : vector<32x1xi32>
    %c31_i32 = arith.constant 31 : i32
    %37 = tpu.dynamic_rotate %10 by %c31_i32 dim 0 : vector<32x512xf32>, i32 -> vector<32x512xf32>
    %cst_13 = arith.constant 0.000000e+00 : f32
    %38 = vector.shape_cast %36 : vector<32x1xi1> to vector<32x1xi1>
    %39 = vector.broadcast %38 : vector<32x1xi1> to vector<32x512xi1>
    %40 = vector.broadcast %cst_13 : f32 to vector<32x512xf32>
    %41 = arith.select %39, %40, %37 : vector<32x512xi1>, vector<32x512xf32>
    %c0_14 = arith.constant 0 : index
    %c0_15 = arith.constant 0 : index
    %42 = vector.load %arg4[%c0_14, %c0_15] : memref<9x512xf32, #tpu.memory_space<vmem>>, vector<9x512xf32>
    %cst_16 = arith.constant 0.000000e+00 : f32
    %43 = vector.broadcast %cst_16 : f32 to vector<32x512xf32>
    %c32_i32 = arith.constant 32 : i32
    %44 = tpu.dynamic_rotate %34 by %c32_i32 dim 1 : vector<32x512xf32>, i32 -> vector<32x512xf32>
    %45 = vector.extract_strided_slice %42 {offsets = [0, 0], sizes = [1, 512], strides = [1, 1]} : vector<9x512xf32> to vector<1x512xf32>
    %46 = vector.broadcast %45 : vector<1x512xf32> to vector<32x512xf32>
    %47 = arith.mulf %44, %46 : vector<32x512xf32>
    %48 = arith.addf %43, %47 : vector<32x512xf32>
    %49 = vector.extract_strided_slice %42 {offsets = [1, 0], sizes = [1, 512], strides = [1, 1]} : vector<9x512xf32> to vector<1x512xf32>
    %50 = vector.broadcast %49 : vector<1x512xf32> to vector<32x512xf32>
    %51 = arith.mulf %34, %50 : vector<32x512xf32>
    %52 = arith.addf %48, %51 : vector<32x512xf32>
    %c480_i32 = arith.constant 480 : i32
    %53 = tpu.dynamic_rotate %34 by %c480_i32 dim 1 : vector<32x512xf32>, i32 -> vector<32x512xf32>
    %54 = vector.extract_strided_slice %42 {offsets = [2, 0], sizes = [1, 512], strides = [1, 1]} : vector<9x512xf32> to vector<1x512xf32>
    %55 = vector.broadcast %54 : vector<1x512xf32> to vector<32x512xf32>
    %56 = arith.mulf %53, %55 : vector<32x512xf32>
    %57 = arith.addf %52, %56 : vector<32x512xf32>
    %c32_i32_17 = arith.constant 32 : i32
    %58 = tpu.dynamic_rotate %10 by %c32_i32_17 dim 1 : vector<32x512xf32>, i32 -> vector<32x512xf32>
    %59 = vector.extract_strided_slice %42 {offsets = [3, 0], sizes = [1, 512], strides = [1, 1]} : vector<9x512xf32> to vector<1x512xf32>
    %60 = vector.broadcast %59 : vector<1x512xf32> to vector<32x512xf32>
    %61 = arith.mulf %58, %60 : vector<32x512xf32>
    %62 = arith.addf %57, %61 : vector<32x512xf32>
    %63 = vector.extract_strided_slice %42 {offsets = [4, 0], sizes = [1, 512], strides = [1, 1]} : vector<9x512xf32> to vector<1x512xf32>
    %64 = vector.broadcast %63 : vector<1x512xf32> to vector<32x512xf32>
    %65 = arith.mulf %10, %64 : vector<32x512xf32>
    %66 = arith.addf %62, %65 : vector<32x512xf32>
    %c480_i32_18 = arith.constant 480 : i32
    %67 = tpu.dynamic_rotate %10 by %c480_i32_18 dim 1 : vector<32x512xf32>, i32 -> vector<32x512xf32>
    %68 = vector.extract_strided_slice %42 {offsets = [5, 0], sizes = [1, 512], strides = [1, 1]} : vector<9x512xf32> to vector<1x512xf32>
    %69 = vector.broadcast %68 : vector<1x512xf32> to vector<32x512xf32>
    %70 = arith.mulf %67, %69 : vector<32x512xf32>
    %71 = arith.addf %66, %70 : vector<32x512xf32>
    %c32_i32_19 = arith.constant 32 : i32
    %72 = tpu.dynamic_rotate %41 by %c32_i32_19 dim 1 : vector<32x512xf32>, i32 -> vector<32x512xf32>
    %73 = vector.extract_strided_slice %42 {offsets = [6, 0], sizes = [1, 512], strides = [1, 1]} : vector<9x512xf32> to vector<1x512xf32>
    %74 = vector.broadcast %73 : vector<1x512xf32> to vector<32x512xf32>
    %75 = arith.mulf %72, %74 : vector<32x512xf32>
    %76 = arith.addf %71, %75 : vector<32x512xf32>
    %77 = vector.extract_strided_slice %42 {offsets = [7, 0], sizes = [1, 512], strides = [1, 1]} : vector<9x512xf32> to vector<1x512xf32>
    %78 = vector.broadcast %77 : vector<1x512xf32> to vector<32x512xf32>
    %79 = arith.mulf %41, %78 : vector<32x512xf32>
    %80 = arith.addf %76, %79 : vector<32x512xf32>
    %c480_i32_20 = arith.constant 480 : i32
    %81 = tpu.dynamic_rotate %41 by %c480_i32_20 dim 1 : vector<32x512xf32>, i32 -> vector<32x512xf32>
    %82 = vector.extract_strided_slice %42 {offsets = [8, 0], sizes = [1, 512], strides = [1, 1]} : vector<9x512xf32> to vector<1x512xf32>
    %83 = vector.broadcast %82 : vector<1x512xf32> to vector<32x512xf32>
    %84 = arith.mulf %81, %83 : vector<32x512xf32>
    %85 = arith.addf %80, %84 : vector<32x512xf32>
    %c0_21 = arith.constant 0 : index
    %c0_22 = arith.constant 0 : index
    %86 = vector.load %arg5[%c0_21, %c0_22] : memref<1x512xf32, #tpu.memory_space<vmem>>, vector<1x512xf32>
    %87 = vector.broadcast %86 : vector<1x512xf32> to vector<32x512xf32>
    %88 = arith.addf %85, %87 : vector<32x512xf32>
    %cst_23 = arith.constant 0.000000e+00 : f32
    %cst_24 = arith.constant 6.000000e+00 : f32
    %89 = vector.broadcast %cst_23 : f32 to vector<32x512xf32>
    %90 = arith.maximumf %89, %88 : vector<32x512xf32>
    %91 = vector.broadcast %cst_24 : f32 to vector<32x512xf32>
    %92 = arith.minimumf %91, %90 : vector<32x512xf32>
    %93 = arith.truncf %92 : vector<32x512xf32> to vector<32x512xbf16>
    %c0_25 = arith.constant 0 : index
    %c0_26 = arith.constant 0 : index
    %94 = vector.load %arg6[%c0_25, %c0_26] : memref<512x128xbf16, #tpu.memory_space<vmem>>, vector<512x128xbf16>
    %cst_27 = arith.constant dense<0.000000e+00> : vector<32x128xf32>
    %95 = tpu.matmul %93, %94, %cst_27 {dimension_numbers = #tpu.dot_dimension_numbers<[1], [0], [0], [1], [0, 0, 1, 1], [], []>} : vector<32x512xbf16>, vector<512x128xbf16>, vector<32x128xf32> -> vector<32x128xf32>
    %c0_28 = arith.constant 0 : index
    %c0_29 = arith.constant 0 : index
    %96 = vector.load %arg7[%c0_28, %c0_29] : memref<1x128xf32, #tpu.memory_space<vmem>>, vector<1x128xf32>
    %97 = vector.broadcast %96 : vector<1x128xf32> to vector<32x128xf32>
    %98 = arith.addf %95, %97 : vector<32x128xf32>
    %99 = arith.addf %98, %0 : vector<32x128xf32>
    %c0_30 = arith.constant 0 : index
    %c0_31 = arith.constant 0 : index
    %100 = vector.load %arg8[%c0_30, %c0_31] : memref<32x128xf32, #tpu.memory_space<vmem>>, vector<32x128xf32>
    tpu.vector_store %arg8[%c0_30, %c0_31], %99 {strides = array<i32>} : memref<32x128xf32, #tpu.memory_space<vmem>>, vector<32x128xf32>,
    return
  }
  func.func @transform_0(%arg0: i32) -> (i32, i32) {
    %c0_i32 = arith.constant 0 : i32
    %c0_i32_0 = arith.constant 0 : i32
    return %arg0, %c0_i32 : i32, i32
  }
  func.func @transform_1(%arg0: i32) -> (i32, i32) {
    %c0_i32 = arith.constant 0 : i32
    %c0_i32_0 = arith.constant 0 : i32
    %c0_i32_1 = arith.constant 0 : i32
    return %c0_i32, %c0_i32_0 : i32, i32
  }
  func.func @transform_2(%arg0: i32) -> (i32, i32) {
    %c0_i32 = arith.constant 0 : i32
    %c0_i32_0 = arith.constant 0 : i32
    %c0_i32_1 = arith.constant 0 : i32
    return %c0_i32, %c0_i32_0 : i32, i32
  }
  func.func @transform_3(%arg0: i32) -> (i32, i32) {
    %c0_i32 = arith.constant 0 : i32
    %c0_i32_0 = arith.constant 0 : i32
    %c0_i32_1 = arith.constant 0 : i32
    return %c0_i32, %c0_i32_0 : i32, i32
  }
  func.func @transform_4(%arg0: i32) -> (i32, i32) {
    %c0_i32 = arith.constant 0 : i32
    %c0_i32_0 = arith.constant 0 : i32
    %c0_i32_1 = arith.constant 0 : i32
    return %c0_i32, %c0_i32_0 : i32, i32
  }
  func.func @transform_5(%arg0: i32) -> (i32, i32) {
    %c0_i32 = arith.constant 0 : i32
    %c0_i32_0 = arith.constant 0 : i32
    %c0_i32_1 = arith.constant 0 : i32
    return %c0_i32, %c0_i32_0 : i32, i32
  }
  func.func @transform_6(%arg0: i32) -> (i32, i32) {
    %c0_i32 = arith.constant 0 : i32
    %c0_i32_0 = arith.constant 0 : i32
    %c0_i32_1 = arith.constant 0 : i32
    return %c0_i32, %c0_i32_0 : i32, i32
  }
  func.func @transform_7(%arg0: i32) -> (i32, i32) {
    %c0_i32 = arith.constant 0 : i32
    %c0_i32_0 = arith.constant 0 : i32
    return %arg0, %c0_i32 : i32, i32
  }
}

</mosaic_0001>

<llo_original>
// kernel: inverted_residual.1
$region0: #{inverted_residual.1}
  #allocation0 [shape = 'u32[]', space=smem, size = 0x4, offset = 0x4, fixed_abs, tag = 'smem constant byte address 0x4 - core index']
  #allocation1 [shape = 'u32[144,128]{1,0:T(1,128)}', space=vmem, size = 0x12000, scoped, tag = 'internal scratch']
  %s0 = inlined_call_operand.vmem [shape: f32[64,128], index: 0, kind: input, shape index: {}]
  %s1 = inlined_call_operand.vmem [shape: bf16[128,512], index: 1, kind: input, shape index: {}]
  %s2 = inlined_call_operand.vmem [shape: f32[1,512], index: 2, kind: input, shape index: {}]
  %s3 = inlined_call_operand.vmem [shape: f32[9,512], index: 3, kind: input, shape index: {}]
  %s4 = inlined_call_operand.vmem [shape: f32[1,512], index: 4, kind: input, shape index: {}]
  %s5 = inlined_call_operand.vmem [shape: bf16[512,128], index: 5, kind: input, shape index: {}]
  %s6 = inlined_call_operand.vmem [shape: f32[1,128], index: 6, kind: input, shape index: {}]
  %s7 = inlined_call_operand.vmem [shape: f32[64,128], index: 7, kind: output, shape index: {}]
  %s8 = sld [smem:[#allocation0]]
  $region61: #{inverted_residual.1} parent=0
    _
  %s10 = ssub.s32 1, %s8
  %s11 = scalar_select 0, %s10, %s8
  loop: start=0, step=1, limit=4
  $region2: #{inverted_residual.1} parent=0 // loop_pre_header
    _
  $region3: #{inverted_residual.1} parent=0 // loop_header
    %s13 = sphi 0, %s17
    %p14 = scmp.ge.s32.totalorder %s13, 4
    %s23 = sphi 0, %s25
    %s26 = sphi 0, %s23
    %s27 = sphi 0, %s26
    %s43 = sphi 0, %s27
    %s47 = sphi 0, %s47
    %s49 = sphi 0, %s47
    %s50 = sphi 0, %s49
    %s64 = sphi 0, %s50
    %s68 = sphi 0, %s68
    %s70 = sphi 0, %s68
    %s71 = sphi 0, %s70
    %s85 = sphi 0, %s71
    %s89 = sphi 0, %s89
    %s91 = sphi 0, %s89
    %s92 = sphi 0, %s91
    %s106 = sphi 0, %s92
    %s110 = sphi 0, %s110
    %s112 = sphi 0, %s110
    %s113 = sphi 0, %s112
    %s127 = sphi 0, %s113
    %s131 = sphi 0, %s131
    %s133 = sphi 0, %s131
    %s134 = sphi 0, %s133
    %s148 = sphi 0, %s134
    %s152 = sphi 0, %s152
    %s154 = sphi 0, %s152
    %s155 = sphi 0, %s154
    %s169 = sphi 0, %s155
    %s175 = sphi 0, %s177
    %s178 = sphi 0, %s175
    %s179 = sphi 0, %s178
    %s195 = sphi 0, %s179
  $region4: #{inverted_residual.1} parent=0 // loop_header_branch
    %16 = sbr.rel (%p14) target = $region8
  $region5: #{inverted_residual.1} parent=0 // loop_body
    %s18 = ssub.s32 %s13, 1
    %s19 = ssub.s32 %s13, 2
    %s20 = sadd.s32 %s13, 1
    %s21 = ssub.s32 %s13, %s20
    %p22 = scmp.eq.s32.totalorder %s21, 0
    %s24 = sadd.s32 %s23, 1
    %s25 = scalar_select %p22, %s23, %s24
    %p28 = pneg %p22
    %p29 = scmp.eq.s32.totalorder %s13, 1
    %p30 = por %p28, %p29
    %p31 = scmp.ne.s32.totalorder %s23, %s26
    %p32 = scmp.eq.s32.totalorder %s13, 0
    %p33 = por %p31, %p32
    %p34 = scmp.ne.s32.totalorder %s23, %s26
    %p35 = scmp.eq.s32.totalorder %s18, 1
    %p36 = por %p34, %p35
    %p37 = scmp.ne.s32.totalorder %s26, %s27
    %p38 = scmp.eq.s32.totalorder %s18, 0
    %p39 = por %p37, %p38
    %p40 = scmp.ne.s32.totalorder %s26, %s27
    %p41 = scmp.eq.s32.totalorder %s19, 1
    %p42 = por %p40, %p41
    %p44 = scmp.ne.s32.totalorder %s27, %s43
    %p45 = scmp.eq.s32.totalorder %s19, 0
    %p46 = por %p44, %p45
    %s48 = sadd.s32 %s47, 1
    %p51 = scmp.eq.s32.totalorder %s13, 1
    %p52 = scmp.ne.s32.totalorder %s47, %s49
    %p53 = scmp.eq.s32.totalorder %s13, 0
    %p54 = por %p52, %p53
    %p55 = scmp.ne.s32.totalorder %s47, %s49
    %p56 = scmp.eq.s32.totalorder %s18, 1
    %p57 = por %p55, %p56
    %p58 = scmp.ne.s32.totalorder %s49, %s50
    %p59 = scmp.eq.s32.totalorder %s18, 0
    %p60 = por %p58, %p59
    %p61 = scmp.ne.s32.totalorder %s49, %s50
    %p62 = scmp.eq.s32.totalorder %s19, 1
    %p63 = por %p61, %p62
    %p65 = scmp.ne.s32.totalorder %s50, %s64
    %p66 = scmp.eq.s32.totalorder %s19, 0
    %p67 = por %p65, %p66
    %s69 = sadd.s32 %s68, 1
    %p72 = scmp.eq.s32.totalorder %s13, 1
    %p73 = scmp.ne.s32.totalorder %s68, %s70
    %p74 = scmp.eq.s32.totalorder %s13, 0
    %p75 = por %p73, %p74
    %p76 = scmp.ne.s32.totalorder %s68, %s70
    %p77 = scmp.eq.s32.totalorder %s18, 1
    %p78 = por %p76, %p77
    %p79 = scmp.ne.s32.totalorder %s70, %s71
    %p80 = scmp.eq.s32.totalorder %s18, 0
    %p81 = por %p79, %p80
    %p82 = scmp.ne.s32.totalorder %s70, %s71
    %p83 = scmp.eq.s32.totalorder %s19, 1
    %p84 = por %p82, %p83
    %p86 = scmp.ne.s32.totalorder %s71, %s85
    %p87 = scmp.eq.s32.totalorder %s19, 0
    %p88 = por %p86, %p87
    %s90 = sadd.s32 %s89, 1
    %p93 = scmp.eq.s32.totalorder %s13, 1
    %p94 = scmp.ne.s32.totalorder %s89, %s91
    %p95 = scmp.eq.s32.totalorder %s13, 0
    %p96 = por %p94, %p95
    %p97 = scmp.ne.s32.totalorder %s89, %s91
    %p98 = scmp.eq.s32.totalorder %s18, 1
    %p99 = por %p97, %p98
    %p100 = scmp.ne.s32.totalorder %s91, %s92
    %p101 = scmp.eq.s32.totalorder %s18, 0
    %p102 = por %p100, %p101
    %p103 = scmp.ne.s32.totalorder %s91, %s92
    %p104 = scmp.eq.s32.totalorder %s19, 1
    %p105 = por %p103, %p104
    %p107 = scmp.ne.s32.totalorder %s92, %s106
    %p108 = scmp.eq.s32.totalorder %s19, 0
    %p109 = por %p107, %p108
    %s111 = sadd.s32 %s110, 1
    %p114 = scmp.eq.s32.totalorder %s13, 1
    %p115 = scmp.ne.s32.totalorder %s110, %s112
    %p116 = scmp.eq.s32.totalorder %s13, 0
    %p117 = por %p115, %p116
    %p118 = scmp.ne.s32.totalorder %s110, %s112
    %p119 = scmp.eq.s32.totalorder %s18, 1
    %p120 = por %p118, %p119
    %p121 = scmp.ne.s32.totalorder %s112, %s113
    %p122 = scmp.eq.s32.totalorder %s18, 0
    %p123 = por %p121, %p122
    %p124 = scmp.ne.s32.totalorder %s112, %s113
    %p125 = scmp.eq.s32.totalorder %s19, 1
    %p126 = por %p124, %p125
    %p128 = scmp.ne.s32.totalorder %s113, %s127
    %p129 = scmp.eq.s32.totalorder %s19, 0
    %p130 = por %p128, %p129
    %s132 = sadd.s32 %s131, 1
    %p135 = scmp.eq.s32.totalorder %s13, 1
    %p136 = scmp.ne.s32.totalorder %s131, %s133
    %p137 = scmp.eq.s32.totalorder %s13, 0
    %p138 = por %p136, %p137
    %p139 = scmp.ne.s32.totalorder %s131, %s133
    %p140 = scmp.eq.s32.totalorder %s18, 1
    %p141 = por %p139, %p140
    %p142 = scmp.ne.s32.totalorder %s133, %s134
    %p143 = scmp.eq.s32.totalorder %s18, 0
    %p144 = por %p142, %p143
    %p145 = scmp.ne.s32.totalorder %s133, %s134
    %p146 = scmp.eq.s32.totalorder %s19, 1
    %p147 = por %p145, %p146
    %p149 = scmp.ne.s32.totalorder %s134, %s148
    %p150 = scmp.eq.s32.totalorder %s19, 0
    %p151 = por %p149, %p150
    %s153 = sadd.s32 %s152, 1
    %p156 = scmp.eq.s32.totalorder %s13, 1
    %p157 = scmp.ne.s32.totalorder %s152, %s154
    %p158 = scmp.eq.s32.totalorder %s13, 0
    %p159 = por %p157, %p158
    %p160 = scmp.ne.s32.totalorder %s152, %s154
    %p161 = scmp.eq.s32.totalorder %s18, 1
    %p162 = por %p160, %p161
    %p163 = scmp.ne.s32.totalorder %s154, %s155
    %p164 = scmp.eq.s32.totalorder %s18, 0
    %p165 = por %p163, %p164
    %p166 = scmp.ne.s32.totalorder %s154, %s155
    %p167 = scmp.eq.s32.totalorder %s19, 1
    %p168 = por %p166, %p167
    %p170 = scmp.ne.s32.totalorder %s155, %s169
    %p171 = scmp.eq.s32.totalorder %s19, 0
    %p172 = por %p170, %p171
    %s173 = ssub.s32 %s13, %s20
    %p174 = scmp.eq.s32.totalorder %s173, 0
    %s176 = sadd.s32 %s175, 1
    %s177 = scalar_select %p174, %s175, %s176
    %p180 = pneg %p174
    %p181 = scmp.eq.s32.totalorder %s13, 1
    %p182 = por %p180, %p181
    %p183 = scmp.ne.s32.totalorder %s175, %s178
    %p184 = scmp.eq.s32.totalorder %s13, 0
    %p185 = por %p183, %p184
    %p186 = scmp.ne.s32.totalorder %s175, %s178
    %p187 = scmp.eq.s32.totalorder %s18, 1
    %p188 = por %p186, %p187
    %p189 = scmp.ne.s32.totalorder %s178, %s179
    %p190 = scmp.eq.s32.totalorder %s18, 0
    %p191 = por %p189, %p190
    %p192 = scmp.ne.s32.totalorder %s178, %s179
    %p193 = scmp.eq.s32.totalorder %s19, 1
    %p194 = por %p192, %p193
    %p196 = scmp.ne.s32.totalorder %s179, %s195
    %p197 = scmp.eq.s32.totalorder %s19, 0
    %p198 = por %p196, %p197
    %p199 = scmp.le.s32.totalorder 1, %s13
    %p200 = scmp.lt.s32.totalorder %s13, 3
    %p201 = pnand %p199, %p200
    %p202 = pneg %p201
    // Predicated region
    $region9: #{inverted_residual.1} parent=5 // pred_check
      _
    $region10: #{inverted_residual.1} parent=5 // pred_check_branch
      %204 = sbr.rel (%p201) target = $region12
    $region11: #{inverted_residual.1} parent=5 // pred_region
      %s205 = ssub.s32 %s13, 1
      // Predicated region
      $region13: #{inverted_residual.1} parent=11 // pred_check
        %p206 = pneg %p60
      $region14: #{inverted_residual.1} parent=11 // pred_check_branch
        %208 = sbr.rel (%p206) target = $region16
      $region15: #{inverted_residual.1} parent=11 // pred_region
        _
      $region16: #{inverted_residual.1} parent=11 // pred_fallthru
        _
      // Predicated region
      $region17: #{inverted_residual.1} parent=11 // pred_check
        %p209 = pneg %p81
      $region18: #{inverted_residual.1} parent=11 // pred_check_branch
        %211 = sbr.rel (%p209) target = $region20
      $region19: #{inverted_residual.1} parent=11 // pred_region
        _
      $region20: #{inverted_residual.1} parent=11 // pred_fallthru
        _
      // Predicated region
      $region21: #{inverted_residual.1} parent=11 // pred_check
        %p212 = pneg %p102
      $region22: #{inverted_residual.1} parent=11 // pred_check_branch
        %214 = sbr.rel (%p212) target = $region24
      $region23: #{inverted_residual.1} parent=11 // pred_region
        _
      $region24: #{inverted_residual.1} parent=11 // pred_fallthru
        _
      // Predicated region
      $region25: #{inverted_residual.1} parent=11 // pred_check
        %p215 = pneg %p123
      $region26: #{inverted_residual.1} parent=11 // pred_check_branch
        %217 = sbr.rel (%p215) target = $region28
      $region27: #{inverted_residual.1} parent=11 // pred_region
        _
      $region28: #{inverted_residual.1} parent=11 // pred_fallthru
        _
      // Predicated region
      $region29: #{inverted_residual.1} parent=11 // pred_check
        %p218 = pneg %p144
      $region30: #{inverted_residual.1} parent=11 // pred_check_branch
        %220 = sbr.rel (%p218) target = $region32
      $region31: #{inverted_residual.1} parent=11 // pred_region
        _
      $region32: #{inverted_residual.1} parent=11 // pred_fallthru
        _
      // Predicated region
      $region33: #{inverted_residual.1} parent=11 // pred_check
        %p221 = pneg %p165
      $region34: #{inverted_residual.1} parent=11 // pred_check_branch
        %223 = sbr.rel (%p221) target = $region36
      $region35: #{inverted_residual.1} parent=11 // pred_region
        _
      $region36: #{inverted_residual.1} parent=11 // pred_fallthru
        _
    $region12: #{inverted_residual.1} parent=5 // pred_fallthru
      _
    %p224 = scmp.lt.s32.totalorder %s13, 2
    // Predicated region
    $region37: #{inverted_residual.1} parent=5 // pred_check
      %p225 = pneg %p224
    $region38: #{inverted_residual.1} parent=5 // pred_check_branch
      %227 = sbr.rel (%p225) target = $region40
    $region39: #{inverted_residual.1} parent=5 // pred_region
      // Predicated region
      $region41: #{inverted_residual.1} parent=39 // pred_check
        %p228 = pneg %p33
      $region42: #{inverted_residual.1} parent=39 // pred_check_branch
        %230 = sbr.rel (%p228) target = $region44
      $region43: #{inverted_residual.1} parent=39 // pred_region
        %s231 = smul.u32 4, %s13
        %p232 = scmp.lt.s32.totalorder %s231, 7
        %s233 = scalar_select %p232, %s231, 7
        %s234 = smul.addr %s233, 8
        %s235 = scalar_lea.vmem %s0, %s234
        %s236 = smul.u32 4, %s13
      $region44: #{inverted_residual.1} parent=39 // pred_fallthru
        _
    $region40: #{inverted_residual.1} parent=5 // pred_fallthru
      _
    %p237 = scmp.le.s32.totalorder 1, %s13
    %p238 = scmp.lt.s32.totalorder %s13, 3
    %p239 = pnand %p237, %p238
    %p240 = pneg %p239
    // Predicated region
    $region45: #{inverted_residual.1} parent=5 // pred_check
      _
    $region46: #{inverted_residual.1} parent=5 // pred_check_branch
      %242 = sbr.rel (%p239) target = $region48
    $region47: #{inverted_residual.1} parent=5 // pred_region
      %s243 = ssub.s32 %s13, 1
      %s244 = smul.u32 4, %s18
      %p245 = scmp.lt.s32.totalorder %s244, 7
      %s246 = scalar_select %p245, %s244, 7
      %s247 = smul.addr %s246, 8
      %s248 = scalar_lea.vmem %s0, %s247
      %p249 = pneg %p39
      %p250 = pneg %p36
      %p251 = pneg %p60
      %p252 = pneg %p57
      %p253 = pneg %p81
      %p254 = pneg %p78
      %p255 = pneg %p102
      %p256 = pneg %p99
      %p257 = pneg %p123
      %p258 = pneg %p120
      %p259 = pneg %p144
      %p260 = pneg %p141
      %p261 = pneg %p165
      %p262 = pneg %p162
      %p263 = pneg %p191
      %p264 = pneg %p188
      %s265 = smul.u32 4, %s18
      %p266 = scmp.lt.s32.totalorder %s265, 7
      %s267 = scalar_select %p266, %s265, 7
      %s268 = smul.addr %s267, 8
      %s269 = scalar_lea.vmem %s7, %s268
      %s270 = smul.u32 4, %s18
      %p271 = scmp.lt.s32.totalorder %s270, 7
      %s272 = scalar_select %p271, %s270, 7
      %s273 = smul.addr %s272, 8
      %s274 = scalar_lea.vmem %s0, %s273
      %s275 = smul.u32 4, %s18
      %s276 = smul.u32 4, %s18
      %p277 = scmp.lt.s32.totalorder %s276, 7
      %s278 = scalar_select %p277, %s276, 7
      %s279 = smul.addr %s278, 8
      %s280 = scalar_lea.vmem %s7, %s279
      %s281 = smul.u32 4, %s18
      %v283 = vld [vmem:[%s274] sm:$0xff]
      %v284 = vld [vmem:[%s274 + $0x8] sm:$0xff]
      %v285 = vld [vmem:[%s274 + $0x10] sm:$0xff]
      %v286 = vld [vmem:[%s274 + $0x18] sm:$0xff]
      %v287 = vpack.c.bf16 %v284, %v283
      %v288 = vpack.c.bf16 %v286, %v285
      %v289 = vld [vmem:[%s1] sm:$0xff]
      %v290 = vld [vmem:[%s1 + $0x8] sm:$0xff]
      %v291 = vld [vmem:[%s1 + $0x10] sm:$0xff]
      %v292 = vld [vmem:[%s1 + $0x18] sm:$0xff]
      %v293 = vld [vmem:[%s1 + $0x20] sm:$0xff]
      %v294 = vld [vmem:[%s1 + $0x28] sm:$0xff]
      %v295 = vld [vmem:[%s1 + $0x30] sm:$0xff]
      %v296 = vld [vmem:[%s1 + $0x38] sm:$0xff]
      %v297 = vld [vmem:[%s1 + $0x40] sm:$0xff]
      %v298 = vld [vmem:[%s1 + $0x48] sm:$0xff]
      %v299 = vld [vmem:[%s1 + $0x50] sm:$0xff]
      %v300 = vld [vmem:[%s1 + $0x58] sm:$0xff]
      %v301 = vld [vmem:[%s1 + $0x60] sm:$0xff]
      %v302 = vld [vmem:[%s1 + $0x68] sm:$0xff]
      %v303 = vld [vmem:[%s1 + $0x70] sm:$0xff]
      %v304 = vld [vmem:[%s1 + $0x78] sm:$0xff]
      %v305 = vld [vmem:[%s1 + $0x80] sm:$0xff]
      %v306 = vld [vmem:[%s1 + $0x88] sm:$0xff]
      %v307 = vld [vmem:[%s1 + $0x90] sm:$0xff]
      %v308 = vld [vmem:[%s1 + $0x98] sm:$0xff]
      %v309 = vld [vmem:[%s1 + $0xa0] sm:$0xff]
      %v310 = vld [vmem:[%s1 + $0xa8] sm:$0xff]
      %v311 = vld [vmem:[%s1 + $0xb0] sm:$0xff]
      %v312 = vld [vmem:[%s1 + $0xb8] sm:$0xff]
      %v313 = vld [vmem:[%s1 + $0xc0] sm:$0xff]
      %v314 = vld [vmem:[%s1 + $0xc8] sm:$0xff]
      %v315 = vld [vmem:[%s1 + $0xd0] sm:$0xff]
      %v316 = vld [vmem:[%s1 + $0xd8] sm:$0xff]
      %v317 = vld [vmem:[%s1 + $0xe0] sm:$0xff]
      %v318 = vld [vmem:[%s1 + $0xe8] sm:$0xff]
      %v319 = vld [vmem:[%s1 + $0xf0] sm:$0xff]
      %v320 = vld [vmem:[%s1 + $0xf8] sm:$0xff]
      %v321 = vld [vmem:[%s2] sm:$0xf]
      %v323 = vlaneseq
      %v324 = vshrl.u32 %v323, 7
      %v325 = vsub.s32 0, %v324
      %v326 = vrot.slane %v321, %v325
      %v327 = vlaneseq
      %v328 = vshrl.u32 %v327, 7
      %v329 = vsub.s32 1, %v328
      %v330 = vrot.slane %v321, %v329
      %v331 = vlaneseq
      %v332 = vshrl.u32 %v331, 7
      %v333 = vsub.s32 2, %v332
      %v334 = vrot.slane %v321, %v333
      %v335 = vlaneseq
      %v336 = vshrl.u32 %v335, 7
      %v337 = vsub.s32 3, %v336
      %v338 = vrot.slane %v321, %v337
      %v375 = vunpack.c.l.b16 %v289
      %v376 = vunpack.c.h.b16 %v289
      %v377 = vunpack.c.l.b16 %v290
      %v378 = vunpack.c.h.b16 %v290
      %v379 = vunpack.c.l.b16 %v291
      %v380 = vunpack.c.h.b16 %v291
      %v381 = vunpack.c.l.b16 %v292
      %v382 = vunpack.c.h.b16 %v292
      %v383 = vunpack.c.l.b16 %v293
      %v384 = vunpack.c.h.b16 %v293
      %v385 = vunpack.c.l.b16 %v294
      %v386 = vunpack.c.h.b16 %v294
      %v387 = vunpack.c.l.b16 %v295
      %v388 = vunpack.c.h.b16 %v295
      %v389 = vunpack.c.l.b16 %v296
      %v390 = vunpack.c.h.b16 %v296
      %v391 = vunpack.c.l.b16 %v297
      %v392 = vunpack.c.h.b16 %v297
      %v393 = vunpack.c.l.b16 %v298
      %v394 = vunpack.c.h.b16 %v298
      %v395 = vunpack.c.l.b16 %v299
      %v396 = vunpack.c.h.b16 %v299
      %v397 = vunpack.c.l.b16 %v300
      %v398 = vunpack.c.h.b16 %v300
      %v399 = vunpack.c.l.b16 %v301
      %v400 = vunpack.c.h.b16 %v301
      %v401 = vunpack.c.l.b16 %v302
      %v402 = vunpack.c.h.b16 %v302
      %v403 = vunpack.c.l.b16 %v303
      %v404 = vunpack.c.h.b16 %v303
      %v405 = vunpack.c.l.b16 %v304
      %v406 = vunpack.c.h.b16 %v304
      %v407 = vunpack.c.l.b16 %v305
      %v408 = vunpack.c.h.b16 %v305
      %v409 = vunpack.c.l.b16 %v306
      %v410 = vunpack.c.h.b16 %v306
      %v411 = vunpack.c.l.b16 %v307
      %v412 = vunpack.c.h.b16 %v307
      %v413 = vunpack.c.l.b16 %v308
      %v414 = vunpack.c.h.b16 %v308
      %v415 = vunpack.c.l.b16 %v309
      %v416 = vunpack.c.h.b16 %v309
      %v417 = vunpack.c.l.b16 %v310
      %v418 = vunpack.c.h.b16 %v310
      %v419 = vunpack.c.l.b16 %v311
      %v420 = vunpack.c.h.b16 %v311
      %v421 = vunpack.c.l.b16 %v312
      %v422 = vunpack.c.h.b16 %v312
      %v423 = vunpack.c.l.b16 %v313
      %v424 = vunpack.c.h.b16 %v313
      %v425 = vunpack.c.l.b16 %v314
      %v426 = vunpack.c.h.b16 %v314
      %v427 = vunpack.c.l.b16 %v315
      %v428 = vunpack.c.h.b16 %v315
      %v429 = vunpack.c.l.b16 %v316
      %v430 = vunpack.c.h.b16 %v316
      %v431 = vunpack.c.l.b16 %v317
      %v432 = vunpack.c.h.b16 %v317
      %v433 = vunpack.c.l.b16 %v318
      %v434 = vunpack.c.h.b16 %v318
      %v435 = vunpack.c.l.b16 %v319
      %v436 = vunpack.c.h.b16 %v319
      %v437 = vunpack.c.l.b16 %v320
      %v438 = vunpack.c.h.b16 %v320
      %v439 = vpack.c.b16 %v379, %v375
      %v440 = vpack.c.b16 %v380, %v376
      %v441 = vpack.c.b16 %v381, %v377
      %v442 = vpack.c.b16 %v382, %v378
      %v443 = vpack.c.b16 %v387, %v383
      %v444 = vpack.c.b16 %v388, %v384
      %v445 = vpack.c.b16 %v389, %v385
      %v446 = vpack.c.b16 %v390, %v386
      %v447 = vpack.c.b16 %v395, %v391
      %v448 = vpack.c.b16 %v396, %v392
      %v449 = vpack.c.b16 %v397, %v393
      %v450 = vpack.c.b16 %v398, %v394
      %v451 = vpack.c.b16 %v403, %v399
      %v452 = vpack.c.b16 %v404, %v400
      %v453 = vpack.c.b16 %v405, %v401
      %v454 = vpack.c.b16 %v406, %v402
      %v455 = vpack.c.b16 %v411, %v407
      %v456 = vpack.c.b16 %v412, %v408
      %v457 = vpack.c.b16 %v413, %v409
      %v458 = vpack.c.b16 %v414, %v410
      %v459 = vpack.c.b16 %v419, %v415
      %v460 = vpack.c.b16 %v420, %v416
      %v461 = vpack.c.b16 %v421, %v417
      %v462 = vpack.c.b16 %v422, %v418
      %v463 = vpack.c.b16 %v427, %v423
      %v464 = vpack.c.b16 %v428, %v424
      %v465 = vpack.c.b16 %v429, %v425
      %v466 = vpack.c.b16 %v430, %v426
      %v467 = vpack.c.b16 %v435, %v431
      %v468 = vpack.c.b16 %v436, %v432
      %v469 = vpack.c.b16 %v437, %v433
      %v470 = vpack.c.b16 %v438, %v434
      %503 = vmatprep.subr.bf16.mxu0 %v440
      %504 = vmatpush1.bf16.msra.mxu0 %v439
      %505 = vmatprep.subr.bf16.mxu0 %v444
      %506 = vmatpush1.bf16.msra.mxu0 %v443
      %507 = vmatprep.subr.bf16.mxu0 %v448
      %508 = vmatpush1.bf16.msra.mxu0 %v447
      %509 = vmatprep.subr.bf16.mxu0 %v452
      %510 = vmatpush1.bf16.msra.mxu0 %v451
      %511 = vmatprep.subr.bf16.mxu0 %v456
      %512 = vmatpush1.bf16.msra.mxu0 %v455
      %513 = vmatprep.subr.bf16.mxu0 %v460
      %514 = vmatpush1.bf16.msra.mxu0 %v459
      %515 = vmatprep.subr.bf16.mxu0 %v464
      %516 = vmatpush1.bf16.msra.mxu0 %v463
      %517 = vmatprep.subr.bf16.mxu0 %v468
      %518 = vmatpush1.bf16.msra.mxu0 %v467
      %519 = vmatprep.subr.bf16.mxu0 0
      %520 = vmatpush1.bf16.msra.mxu0 0
      %521 = vmatprep.subr.bf16.mxu0 0
      %522 = vmatpush1.bf16.msra.mxu0 0
      %523 = vmatprep.subr.bf16.mxu0 0
      %524 = vmatpush1.bf16.msra.mxu0 0
      %525 = vmatprep.subr.bf16.mxu0 0
      %526 = vmatpush1.bf16.msra.mxu0 0
      %527 = vmatprep.subr.bf16.mxu0 0
      %528 = vmatpush1.bf16.msra.mxu0 0
      %529 = vmatprep.subr.bf16.mxu0 0
      %530 = vmatpush1.bf16.msra.mxu0 0
      %531 = vmatprep.subr.bf16.mxu0 0
      %532 = vmatpush1.bf16.msra.mxu0 0
      %533 = vmatprep.subr.bf16.mxu0 0
      %534 = vmatpush1.bf16.msra.mxu0 0
      %535 = vmatprep.mubr.bf16.mxu0 0
      %536 = vmatmul.mubr.bf16.gmra.mrb[0].mxu0 %v287
      %v537 = vpop.f32.mrb[0].mxu0
      %v538 = vadd.f32 %v326, %v537
      %v539 = vpop.f32.mrb[0].mxu0
      %v540 = vadd.f32 %v330, %v539
      %v541 = vpop.f32.mrb[0].mxu0
      %v542 = vadd.f32 %v326, %v541
      %v543 = vpop.f32.mrb[0].mxu0
      %v544 = vadd.f32 %v330, %v543
      %545 = vmatprep.mubr.bf16.mxu0 0
      %546 = vmatmul.mubr.bf16.gmra.mrb[0].mxu0 %v288
      %v547 = vpop.f32.mrb[0].mxu0
      %v548 = vadd.f32 %v326, %v547
      %v549 = vpop.f32.mrb[0].mxu0
      %v550 = vadd.f32 %v330, %v549
      %v551 = vpop.f32.mrb[0].mxu0
      %v552 = vadd.f32 %v326, %v551
      %v553 = vpop.f32.mrb[0].mxu0
      %v554 = vadd.f32 %v330, %v553
      %555 = vdwg.mxu0
      %556 = vmatprep.subr.bf16.mxu0 %v442
      %557 = vmatpush1.bf16.msra.mxu0 %v441
      %558 = vmatprep.subr.bf16.mxu0 %v446
      %559 = vmatpush1.bf16.msra.mxu0 %v445
      %560 = vmatprep.subr.bf16.mxu0 %v450
      %561 = vmatpush1.bf16.msra.mxu0 %v449
      %562 = vmatprep.subr.bf16.mxu0 %v454
      %563 = vmatpush1.bf16.msra.mxu0 %v453
      %564 = vmatprep.subr.bf16.mxu0 %v458
      %565 = vmatpush1.bf16.msra.mxu0 %v457
      %566 = vmatprep.subr.bf16.mxu0 %v462
      %567 = vmatpush1.bf16.msra.mxu0 %v461
      %568 = vmatprep.subr.bf16.mxu0 %v466
      %569 = vmatpush1.bf16.msra.mxu0 %v465
      %570 = vmatprep.subr.bf16.mxu0 %v470
      %571 = vmatpush1.bf16.msra.mxu0 %v469
      %572 = vmatprep.subr.bf16.mxu0 0
      %573 = vmatpush1.bf16.msra.mxu0 0
      %574 = vmatprep.subr.bf16.mxu0 0
      %575 = vmatpush1.bf16.msra.mxu0 0
      %576 = vmatprep.subr.bf16.mxu0 0
      %577 = vmatpush1.bf16.msra.mxu0 0
      %578 = vmatprep.subr.bf16.mxu0 0
      %579 = vmatpush1.bf16.msra.mxu0 0
      %580 = vmatprep.subr.bf16.mxu0 0
      %581 = vmatpush1.bf16.msra.mxu0 0
      %582 = vmatprep.subr.bf16.mxu0 0
      %583 = vmatpush1.bf16.msra.mxu0 0
      %584 = vmatprep.subr.bf16.mxu0 0
      %585 = vmatpush1.bf16.msra.mxu0 0
      %586 = vmatprep.subr.bf16.mxu0 0
      %587 = vmatpush1.bf16.msra.mxu0 0
      %588 = vmatprep.mubr.bf16.mxu0 0
      %589 = vmatmul.mubr.bf16.gmra.mrb[0].mxu0 %v287
      %v590 = vpop.f32.mrb[0].mxu0
      %v591 = vadd.f32 %v334, %v590
      %v592 = vpop.f32.mrb[0].mxu0
      %v593 = vadd.f32 %v338, %v592
      %v594 = vpop.f32.mrb[0].mxu0
      %v595 = vadd.f32 %v334, %v594
      %v596 = vpop.f32.mrb[0].mxu0
      %v597 = vadd.f32 %v338, %v596
      %598 = vmatprep.mubr.bf16.mxu0 0
      %599 = vmatmul.mubr.bf16.gmra.mrb[0].mxu0 %v288
      %v600 = vpop.f32.mrb[0].mxu0
      %v601 = vadd.f32 %v334, %v600
      %v602 = vpop.f32.mrb[0].mxu0
      %v603 = vadd.f32 %v338, %v602
      %v604 = vpop.f32.mrb[0].mxu0
      %v605 = vadd.f32 %v334, %v604
      %v606 = vpop.f32.mrb[0].mxu0
      %v607 = vadd.f32 %v338, %v606
      %608 = vdwg.mxu0
      %v609 = vmax.f32 %v538, 0.0
      %v610 = vmax.f32 %v540, 0.0
      %v611 = vmax.f32 %v591, 0.0
      %v612 = vmax.f32 %v593, 0.0
      %v613 = vmax.f32 %v542, 0.0
      %v614 = vmax.f32 %v544, 0.0
      %v615 = vmax.f32 %v595, 0.0
      %v616 = vmax.f32 %v597, 0.0
      %v617 = vmax.f32 %v548, 0.0
      %v618 = vmax.f32 %v550, 0.0
      %v619 = vmax.f32 %v601, 0.0
      %v620 = vmax.f32 %v603, 0.0
      %v621 = vmax.f32 %v552, 0.0
      %v622 = vmax.f32 %v554, 0.0
      %v623 = vmax.f32 %v605, 0.0
      %v624 = vmax.f32 %v607, 0.0
      %v625 = vmin.f32 %v609, 6.0
      %v626 = vmin.f32 %v610, 6.0
      %v627 = vmin.f32 %v611, 6.0
      %v628 = vmin.f32 %v612, 6.0
      %v629 = vmin.f32 %v613, 6.0
      %v630 = vmin.f32 %v614, 6.0
      %v631 = vmin.f32 %v615, 6.0
      %v632 = vmin.f32 %v616, 6.0
      %v633 = vmin.f32 %v617, 6.0
      %v634 = vmin.f32 %v618, 6.0
      %v635 = vmin.f32 %v619, 6.0
      %v636 = vmin.f32 %v620, 6.0
      %v637 = vmin.f32 %v621, 6.0
      %v638 = vmin.f32 %v622, 6.0
      %v639 = vmin.f32 %v623, 6.0
      %v640 = vmin.f32 %v624, 6.0
      %v641 = vlaneseq
      %v642 = vshrl.u32 %v641, 7
      %v643 = vadd.s32 %v642, 8
      %v644 = vadd.s32 %v642, 16
      %v645 = vadd.s32 %v642, 24
      %vm646 = vcmp.lt.s32.totalorder %v642, 0
      %v647 = vsub.s32 0, %v642
      %v648 = vsel %vm646, %v647, %v642
      %v649 = vshrl.u32 %v648, 4
      %v650 = vand.u32 %v648, 15
      %v651 = vsub.s32 0, %v650
      %v652 = vsel %vm646, %v651, %v650
      %vm653 = vcmp.lt.s32.totalorder %v643, 0
      %v654 = vsub.s32 0, %v643
      %v655 = vsel %vm653, %v654, %v643
      %v656 = vshrl.u32 %v655, 4
      %v657 = vand.u32 %v655, 15
      %v658 = vsub.s32 0, %v657
      %v659 = vsel %vm653, %v658, %v657
      %vm660 = vcmp.lt.s32.totalorder %v644, 0
      %v661 = vsub.s32 0, %v644
      %v662 = vsel %vm660, %v661, %v644
      %v663 = vshrl.u32 %v662, 4
      %v664 = vand.u32 %v662, 15
      %v665 = vsub.s32 0, %v664
      %v666 = vsel %vm660, %v665, %v664
      %vm667 = vcmp.lt.s32.totalorder %v645, 0
      %v668 = vsub.s32 0, %v645
      %v669 = vsel %vm667, %v668, %v645
      %v670 = vshrl.u32 %v669, 4
      %v671 = vand.u32 %v669, 15
      %v672 = vsub.s32 0, %v671
      %v673 = vsel %vm667, %v672, %v671
      %vm674 = vcmp.ne.s32.totalorder %v652, 0
      %vm675 = vcmp.ne.s32.totalorder %v659, 0
      %vm676 = vcmp.ne.s32.totalorder %v666, 0
      %vm677 = vcmp.ne.s32.totalorder %v673, 0
      %vm678 = vcmp.lt.s32.totalorder %v652, 0
      %vm679 = vcmp.lt.s32.totalorder %v659, 0
      %vm680 = vcmp.lt.s32.totalorder %v666, 0
      %vm681 = vcmp.lt.s32.totalorder %v673, 0
      %vm682 = vmand %vm678, %vm674
      %vm683 = vmand %vm679, %vm675
      %vm684 = vmand %vm680, %vm676
      %vm685 = vmand %vm681, %vm677
      %v686 = vadd.s32 %v652, 16
      %v687 = vadd.s32 %v659, 16
      %v688 = vadd.s32 %v666, 16
      %v689 = vadd.s32 %v673, 16
      %v690 = vsel %vm682, %v686, %v652
      %v691 = vsel %vm683, %v687, %v659
      %v692 = vsel %vm684, %v688, %v666
      %v693 = vsel %vm685, %v689, %v673
      %vm694 = vcmp.eq.s32.totalorder %v690, 0
      %vm695 = vcmp.eq.s32.totalorder %v691, 0
      %vm696 = vcmp.eq.s32.totalorder %v692, 0
      %vm697 = vcmp.eq.s32.totalorder %v693, 0
      %v698 = vrot.slane %v625, 7
      %v699 = vrot.slane %v626, 7
      %v700 = vrot.slane %v627, 7
      %v701 = vrot.slane %v628, 7
      %v702 = vrot.slane %v629, 7
      %v703 = vrot.slane %v630, 7
      %v704 = vrot.slane %v631, 7
      %v705 = vrot.slane %v632, 7
      %v706 = vrot.slane %v633, 7
      %v707 = vrot.slane %v634, 7
      %v708 = vrot.slane %v635, 7
      %v709 = vrot.slane %v636, 7
      %v710 = vrot.slane %v637, 7
      %v711 = vrot.slane %v638, 7
      %v712 = vrot.slane %v639, 7
      %v713 = vrot.slane %v640, 7
      %vm714 = vcmp.lt.s32.totalorder %v642, 1
      %v715 = vsel %vm714, %v706, %v710
      %v716 = vsel %vm714, %v707, %v711
      %v717 = vsel %vm714, %v708, %v712
      %v718 = vsel %vm714, %v709, %v713
      %v719 = vsel %vm714, %v702, %v706
      %v720 = vsel %vm714, %v703, %v707
      %v721 = vsel %vm714, %v704, %v708
      %v722 = vsel %vm714, %v705, %v709
      %v723 = vsel %vm714, %v698, %v702
      %v724 = vsel %vm714, %v699, %v703
      %v725 = vsel %vm714, %v700, %v704
      %v726 = vsel %vm714, %v701, %v705
      %v727 = vsel %vm714, %v710, %v698
      %v728 = vsel %vm714, %v711, %v699
      %v729 = vsel %vm714, %v712, %v700
      %v730 = vsel %vm714, %v713, %v701
      %v731 = vsel %vm694, 1, 0
      %v732 = vsel %vm695, 1, 0
      %v733 = vsel %vm696, 1, 0
      %v734 = vsel %vm697, 1, 0
      %vm735 = vcmp.eq.s32.totalorder %v731, 1
      %vm736 = vcmp.eq.s32.totalorder %v732, 1
      %vm737 = vcmp.eq.s32.totalorder %v733, 1
      %vm738 = vcmp.eq.s32.totalorder %v734, 1
      %v739 = vsel %vm735, 0.0, %v727
      %v740 = vsel %vm735, 0.0, %v728
      %v741 = vsel %vm735, 0.0, %v729
      %v742 = vsel %vm735, 0.0, %v730
      %v743 = vsel %vm736, 0.0, %v723
      %v744 = vsel %vm736, 0.0, %v724
      %v745 = vsel %vm736, 0.0, %v725
      %v746 = vsel %vm736, 0.0, %v726
      %v747 = vsel %vm737, 0.0, %v719
      %v748 = vsel %vm737, 0.0, %v720
      %v749 = vsel %vm737, 0.0, %v721
      %v750 = vsel %vm737, 0.0, %v722
      %v751 = vsel %vm738, 0.0, %v715
      %v752 = vsel %vm738, 0.0, %v716
      %v753 = vsel %vm738, 0.0, %v717
      %v754 = vsel %vm738, 0.0, %v718
      %vm755 = vcmp.eq.s32.totalorder %v690, 15
      %vm756 = vcmp.eq.s32.totalorder %v691, 15
      %vm757 = vcmp.eq.s32.totalorder %v692, 15
      %vm758 = vcmp.eq.s32.totalorder %v693, 15
      %v759 = vrot.slane %v625, 1
      %v760 = vrot.slane %v626, 1
      %v761 = vrot.slane %v627, 1
      %v762 = vrot.slane %v628, 1
      %v763 = vrot.slane %v629, 1
      %v764 = vrot.slane %v630, 1
      %v765 = vrot.slane %v631, 1
      %v766 = vrot.slane %v632, 1
      %v767 = vrot.slane %v633, 1
      %v768 = vrot.slane %v634, 1
      %v769 = vrot.slane %v635, 1
      %v770 = vrot.slane %v636, 1
      %v771 = vrot.slane %v637, 1
      %v772 = vrot.slane %v638, 1
      %v773 = vrot.slane %v639, 1
      %v774 = vrot.slane %v640, 1
      %vm775 = vcmp.lt.s32.totalorder %v642, 7
      %v776 = vsel %vm775, %v767, %v771
      %v777 = vsel %vm775, %v768, %v772
      %v778 = vsel %vm775, %v769, %v773
      %v779 = vsel %vm775, %v770, %v774
      %v780 = vsel %vm775, %v763, %v767
      %v781 = vsel %vm775, %v764, %v768
      %v782 = vsel %vm775, %v765, %v769
      %v783 = vsel %vm775, %v766, %v770
      %v784 = vsel %vm775, %v759, %v763
      %v785 = vsel %vm775, %v760, %v764
      %v786 = vsel %vm775, %v761, %v765
      %v787 = vsel %vm775, %v762, %v766
      %v788 = vsel %vm775, %v771, %v759
      %v789 = vsel %vm775, %v772, %v760
      %v790 = vsel %vm775, %v773, %v761
      %v791 = vsel %vm775, %v774, %v762
      %v792 = vsel %vm755, 1, 0
      %v793 = vsel %vm756, 1, 0
      %v794 = vsel %vm757, 1, 0
      %v795 = vsel %vm758, 1, 0
      %vm796 = vcmp.eq.s32.totalorder %v792, 1
      %vm797 = vcmp.eq.s32.totalorder %v793, 1
      %vm798 = vcmp.eq.s32.totalorder %v794, 1
      %vm799 = vcmp.eq.s32.totalorder %v795, 1
      %v800 = vsel %vm796, 0.0, %v784
      %v801 = vsel %vm796, 0.0, %v785
      %v802 = vsel %vm796, 0.0, %v786
      %v803 = vsel %vm796, 0.0, %v787
      %v804 = vsel %vm797, 0.0, %v780
      %v805 = vsel %vm797, 0.0, %v781
      %v806 = vsel %vm797, 0.0, %v782
      %v807 = vsel %vm797, 0.0, %v783
      %v808 = vsel %vm798, 0.0, %v776
      %v809 = vsel %vm798, 0.0, %v777
      %v810 = vsel %vm798, 0.0, %v778
      %v811 = vsel %vm798, 0.0, %v779
      %v812 = vsel %vm799, 0.0, %v788
      %v813 = vsel %vm799, 0.0, %v789
      %v814 = vsel %vm799, 0.0, %v790
      %v815 = vsel %vm799, 0.0, %v791
      %v816 = vld [vmem:[%s3] sm:$0xff]
      %v817 = vld [vmem:[%s3 + $0x8] sm:$0xff]
      %v818 = vld [vmem:[%s3 + $0x10] sm:$0xff]
      %v819 = vld [vmem:[%s3 + $0x18] sm:$0xff]
      %v820 = vld [vmem:[%s3 + $0x20] sm:$0x1]
      %v821 = vld [vmem:[%s3 + $0x28] sm:$0x1]
      %v822 = vld [vmem:[%s3 + $0x30] sm:$0x1]
      %v823 = vld [vmem:[%s3 + $0x38] sm:$0x1]
      %824 = vrot.lane.b32.xlu0 %v739, 32
      %v825 = vpop.permute.xlu0 %824
      %826 = vrot.lane.b32.xlu0 %v743, 32
      %v827 = vpop.permute.xlu0 %826
      %828 = vrot.lane.b32.xlu0 %v747, 32
      %v829 = vpop.permute.xlu0 %828
      %830 = vrot.lane.b32.xlu0 %v751, 32
      %v831 = vpop.permute.xlu0 %830
      %832 = vrot.lane.b32.xlu0 %v740, 32
      %v833 = vpop.permute.xlu0 %832
      %834 = vrot.lane.b32.xlu0 %v744, 32
      %v835 = vpop.permute.xlu0 %834
      %836 = vrot.lane.b32.xlu0 %v748, 32
      %v837 = vpop.permute.xlu0 %836
      %838 = vrot.lane.b32.xlu0 %v752, 32
      %v839 = vpop.permute.xlu0 %838
      %840 = vrot.lane.b32.xlu0 %v741, 32
      %v841 = vpop.permute.xlu0 %840
      %842 = vrot.lane.b32.xlu0 %v745, 32
      %v843 = vpop.permute.xlu0 %842
      %844 = vrot.lane.b32.xlu0 %v749, 32
      %v845 = vpop.permute.xlu0 %844
      %846 = vrot.lane.b32.xlu0 %v753, 32
      %v847 = vpop.permute.xlu0 %846
      %848 = vrot.lane.b32.xlu0 %v742, 32
      %v849 = vpop.permute.xlu0 %848
      %850 = vrot.lane.b32.xlu0 %v746, 32
      %v851 = vpop.permute.xlu0 %850
      %852 = vrot.lane.b32.xlu0 %v750, 32
      %v853 = vpop.permute.xlu0 %852
      %854 = vrot.lane.b32.xlu0 %v754, 32
      %v855 = vpop.permute.xlu0 %854
      %v856 = vlaneseq
      %v857 = vand.u32 %v856, 127
      %vm858 = vcmp.lt.s32.totalorder %v857, 32
      %v859 = vsel %vm858, %v841, %v849
      %v860 = vsel %vm858, %v843, %v851
      %v861 = vsel %vm858, %v845, %v853
      %v862 = vsel %vm858, %v847, %v855
      %v863 = vsel %vm858, %v833, %v841
      %v864 = vsel %vm858, %v835, %v843
      %v865 = vsel %vm858, %v837, %v845
      %v866 = vsel %vm858, %v839, %v847
      %v867 = vsel %vm858, %v825, %v833
      %v868 = vsel %vm858, %v827, %v835
      %v869 = vsel %vm858, %v829, %v837
      %v870 = vsel %vm858, %v831, %v839
      %v871 = vsel %vm858, %v849, %v825
      %v872 = vsel %vm858, %v851, %v827
      %v873 = vsel %vm858, %v853, %v829
      %v874 = vsel %vm858, %v855, %v831
      %v875 = vlaneseq
      %v876 = vshrl.u32 %v875, 7
      %v877 = vsub.s32 0, %v876
      %v878 = vrot.slane %v816, %v877
      %v879 = vlaneseq
      %v880 = vshrl.u32 %v879, 7
      %v881 = vsub.s32 0, %v880
      %v882 = vrot.slane %v817, %v881
      %v883 = vlaneseq
      %v884 = vshrl.u32 %v883, 7
      %v885 = vsub.s32 0, %v884
      %v886 = vrot.slane %v818, %v885
      %v887 = vlaneseq
      %v888 = vshrl.u32 %v887, 7
      %v889 = vsub.s32 0, %v888
      %v890 = vrot.slane %v819, %v889
      %v891 = vmul.f32 %v871, %v878
      %v892 = vmul.f32 %v867, %v882
      %v893 = vmul.f32 %v863, %v886
      %v894 = vmul.f32 %v859, %v890
      %v895 = vmul.f32 %v872, %v878
      %v896 = vmul.f32 %v868, %v882
      %v897 = vmul.f32 %v864, %v886
      %v898 = vmul.f32 %v860, %v890
      %v899 = vmul.f32 %v873, %v878
      %v900 = vmul.f32 %v869, %v882
      %v901 = vmul.f32 %v865, %v886
      %v902 = vmul.f32 %v861, %v890
      %v903 = vmul.f32 %v874, %v878
      %v904 = vmul.f32 %v870, %v882
      %v905 = vmul.f32 %v866, %v886
      %v906 = vmul.f32 %v862, %v890
      %v907 = vadd.f32 %v891, 0.0
      %v908 = vadd.f32 %v892, 0.0
      %v909 = vadd.f32 %v893, 0.0
      %v910 = vadd.f32 %v894, 0.0
      %v911 = vadd.f32 %v895, 0.0
      %v912 = vadd.f32 %v896, 0.0
      %v913 = vadd.f32 %v897, 0.0
      %v914 = vadd.f32 %v898, 0.0
      %v915 = vadd.f32 %v899, 0.0
      %v916 = vadd.f32 %v900, 0.0
      %v917 = vadd.f32 %v901, 0.0
      %v918 = vadd.f32 %v902, 0.0
      %v919 = vadd.f32 %v903, 0.0
      %v920 = vadd.f32 %v904, 0.0
      %v921 = vadd.f32 %v905, 0.0
      %v922 = vadd.f32 %v906, 0.0
      %v923 = vlaneseq
      %v924 = vshrl.u32 %v923, 7
      %v925 = vsub.s32 1, %v924
      %v926 = vrot.slane %v816, %v925
      %v927 = vlaneseq
      %v928 = vshrl.u32 %v927, 7
      %v929 = vsub.s32 1, %v928
      %v930 = vrot.slane %v817, %v929
      %v931 = vlaneseq
      %v932 = vshrl.u32 %v931, 7
      %v933 = vsub.s32 1, %v932
      %v934 = vrot.slane %v818, %v933
      %v935 = vlaneseq
      %v936 = vshrl.u32 %v935, 7
      %v937 = vsub.s32 1, %v936
      %v938 = vrot.slane %v819, %v937
      %v939 = vmul.f32 %v739, %v926
      %v940 = vmul.f32 %v740, %v930
      %v941 = vmul.f32 %v741, %v934
      %v942 = vmul.f32 %v742, %v938
      %v943 = vmul.f32 %v743, %v926
      %v944 = vmul.f32 %v744, %v930
      %v945 = vmul.f32 %v745, %v934
      %v946 = vmul.f32 %v746, %v938
      %v947 = vmul.f32 %v747, %v926
      %v948 = vmul.f32 %v748, %v930
      %v949 = vmul.f32 %v749, %v934
      %v950 = vmul.f32 %v750, %v938
      %v951 = vmul.f32 %v751, %v926
      %v952 = vmul.f32 %v752, %v930
      %v953 = vmul.f32 %v753, %v934
      %v954 = vmul.f32 %v754, %v938
      %v955 = vadd.f32 %v907, %v939
      %v956 = vadd.f32 %v908, %v940
      %v957 = vadd.f32 %v909, %v941
      %v958 = vadd.f32 %v910, %v942
      %v959 = vadd.f32 %v911, %v943
      %v960 = vadd.f32 %v912, %v944
      %v961 = vadd.f32 %v913, %v945
      %v962 = vadd.f32 %v914, %v946
      %v963 = vadd.f32 %v915, %v947
      %v964 = vadd.f32 %v916, %v948
      %v965 = vadd.f32 %v917, %v949
      %v966 = vadd.f32 %v918, %v950
      %v967 = vadd.f32 %v919, %v951
      %v968 = vadd.f32 %v920, %v952
      %v969 = vadd.f32 %v921, %v953
      %v970 = vadd.f32 %v922, %v954
      %971 = vrot.lane.b32.xlu0 %v739, 96
      %v972 = vpop.permute.xlu0 %971
      %973 = vrot.lane.b32.xlu0 %v743, 96
      %v974 = vpop.permute.xlu0 %973
      %975 = vrot.lane.b32.xlu0 %v747, 96
      %v976 = vpop.permute.xlu0 %975
      %977 = vrot.lane.b32.xlu0 %v751, 96
      %v978 = vpop.permute.xlu0 %977
      %979 = vrot.lane.b32.xlu0 %v740, 96
      %v980 = vpop.permute.xlu0 %979
      %981 = vrot.lane.b32.xlu0 %v744, 96
      %v982 = vpop.permute.xlu0 %981
      %983 = vrot.lane.b32.xlu0 %v748, 96
      %v984 = vpop.permute.xlu0 %983
      %985 = vrot.lane.b32.xlu0 %v752, 96
      %v986 = vpop.permute.xlu0 %985
      %987 = vrot.lane.b32.xlu0 %v741, 96
      %v988 = vpop.permute.xlu0 %987
      %989 = vrot.lane.b32.xlu0 %v745, 96
      %v990 = vpop.permute.xlu0 %989
      %991 = vrot.lane.b32.xlu0 %v749, 96
      %v992 = vpop.permute.xlu0 %991
      %993 = vrot.lane.b32.xlu0 %v753, 96
      %v994 = vpop.permute.xlu0 %993
      %995 = vrot.lane.b32.xlu0 %v742, 96
      %v996 = vpop.permute.xlu0 %995
      %997 = vrot.lane.b32.xlu0 %v746, 96
      %v998 = vpop.permute.xlu0 %997
      %999 = vrot.lane.b32.xlu0 %v750, 96
      %v1000 = vpop.permute.xlu0 %999
      %1001 = vrot.lane.b32.xlu0 %v754, 96
      %v1002 = vpop.permute.xlu0 %1001
      %vm1003 = vcmp.lt.s32.totalorder %v857, 96
      %v1004 = vsel %vm1003, %v988, %v996
      %v1005 = vsel %vm1003, %v990, %v998
      %v1006 = vsel %vm1003, %v992, %v1000
      %v1007 = vsel %vm1003, %v994, %v1002
      %v1008 = vsel %vm1003, %v980, %v988
      %v1009 = vsel %vm1003, %v982, %v990
      %v1010 = vsel %vm1003, %v984, %v992
      %v1011 = vsel %vm1003, %v986, %v994
      %v1012 = vsel %vm1003, %v972, %v980
      %v1013 = vsel %vm1003, %v974, %v982
      %v1014 = vsel %vm1003, %v976, %v984
      %v1015 = vsel %vm1003, %v978, %v986
      %v1016 = vsel %vm1003, %v996, %v972
      %v1017 = vsel %vm1003, %v998, %v974
      %v1018 = vsel %vm1003, %v1000, %v976
      %v1019 = vsel %vm1003, %v1002, %v978
      %v1020 = vlaneseq
      %v1021 = vshrl.u32 %v1020, 7
      %v1022 = vsub.s32 2, %v1021
      %v1023 = vrot.slane %v816, %v1022
      %v1024 = vlaneseq
      %v1025 = vshrl.u32 %v1024, 7
      %v1026 = vsub.s32 2, %v1025
      %v1027 = vrot.slane %v817, %v1026
      %v1028 = vlaneseq
      %v1029 = vshrl.u32 %v1028, 7
      %v1030 = vsub.s32 2, %v1029
      %v1031 = vrot.slane %v818, %v1030
      %v1032 = vlaneseq
      %v1033 = vshrl.u32 %v1032, 7
      %v1034 = vsub.s32 2, %v1033
      %v1035 = vrot.slane %v819, %v1034
      %v1036 = vmul.f32 %v1012, %v1023
      %v1037 = vmul.f32 %v1008, %v1027
      %v1038 = vmul.f32 %v1004, %v1031
      %v1039 = vmul.f32 %v1016, %v1035
      %v1040 = vmul.f32 %v1013, %v1023
      %v1041 = vmul.f32 %v1009, %v1027
      %v1042 = vmul.f32 %v1005, %v1031
      %v1043 = vmul.f32 %v1017, %v1035
      %v1044 = vmul.f32 %v1014, %v1023
      %v1045 = vmul.f32 %v1010, %v1027
      %v1046 = vmul.f32 %v1006, %v1031
      %v1047 = vmul.f32 %v1018, %v1035
      %v1048 = vmul.f32 %v1015, %v1023
      %v1049 = vmul.f32 %v1011, %v1027
      %v1050 = vmul.f32 %v1007, %v1031
      %v1051 = vmul.f32 %v1019, %v1035
      %v1052 = vadd.f32 %v955, %v1036
      %v1053 = vadd.f32 %v956, %v1037
      %v1054 = vadd.f32 %v957, %v1038
      %v1055 = vadd.f32 %v958, %v1039
      %v1056 = vadd.f32 %v959, %v1040
      %v1057 = vadd.f32 %v960, %v1041
      %v1058 = vadd.f32 %v961, %v1042
      %v1059 = vadd.f32 %v962, %v1043
      %v1060 = vadd.f32 %v963, %v1044
      %v1061 = vadd.f32 %v964, %v1045
      %v1062 = vadd.f32 %v965, %v1046
      %v1063 = vadd.f32 %v966, %v1047
      %v1064 = vadd.f32 %v967, %v1048
      %v1065 = vadd.f32 %v968, %v1049
      %v1066 = vadd.f32 %v969, %v1050
      %v1067 = vadd.f32 %v970, %v1051
      %1068 = vrot.lane.b32.xlu0 %v625, 32
      %v1069 = vpop.permute.xlu0 %1068
      %1070 = vrot.lane.b32.xlu0 %v629, 32
      %v1071 = vpop.permute.xlu0 %1070
      %1072 = vrot.lane.b32.xlu0 %v633, 32
      %v1073 = vpop.permute.xlu0 %1072
      %1074 = vrot.lane.b32.xlu0 %v637, 32
      %v1075 = vpop.permute.xlu0 %1074
      %1076 = vrot.lane.b32.xlu0 %v626, 32
      %v1077 = vpop.permute.xlu0 %1076
      %1078 = vrot.lane.b32.xlu0 %v630, 32
      %v1079 = vpop.permute.xlu0 %1078
      %1080 = vrot.lane.b32.xlu0 %v634, 32
      %v1081 = vpop.permute.xlu0 %1080
      %1082 = vrot.lane.b32.xlu0 %v638, 32
      %v1083 = vpop.permute.xlu0 %1082
      %1084 = vrot.lane.b32.xlu0 %v627, 32
      %v1085 = vpop.permute.xlu0 %1084
      %1086 = vrot.lane.b32.xlu0 %v631, 32
      %v1087 = vpop.permute.xlu0 %1086
      %1088 = vrot.lane.b32.xlu0 %v635, 32
      %v1089 = vpop.permute.xlu0 %1088
      %1090 = vrot.lane.b32.xlu0 %v639, 32
      %v1091 = vpop.permute.xlu0 %1090
      %1092 = vrot.lane.b32.xlu0 %v628, 32
      %v1093 = vpop.permute.xlu0 %1092
      %1094 = vrot.lane.b32.xlu0 %v632, 32
      %v1095 = vpop.permute.xlu0 %1094
      %1096 = vrot.lane.b32.xlu0 %v636, 32
      %v1097 = vpop.permute.xlu0 %1096
      %1098 = vrot.lane.b32.xlu0 %v640, 32
      %v1099 = vpop.permute.xlu0 %1098
      %v1100 = vsel %vm858, %v1085, %v1093
      %v1101 = vsel %vm858, %v1087, %v1095
      %v1102 = vsel %vm858, %v1089, %v1097
      %v1103 = vsel %vm858, %v1091, %v1099
      %v1104 = vsel %vm858, %v1077, %v1085
      %v1105 = vsel %vm858, %v1079, %v1087
      %v1106 = vsel %vm858, %v1081, %v1089
      %v1107 = vsel %vm858, %v1083, %v1091
      %v1108 = vsel %vm858, %v1069, %v1077
      %v1109 = vsel %vm858, %v1071, %v1079
      %v1110 = vsel %vm858, %v1073, %v1081
      %v1111 = vsel %vm858, %v1075, %v1083
      %v1112 = vsel %vm858, %v1093, %v1069
      %v1113 = vsel %vm858, %v1095, %v1071
      %v1114 = vsel %vm858, %v1097, %v1073
      %v1115 = vsel %vm858, %v1099, %v1075
      %v1116 = vlaneseq
      %v1117 = vshrl.u32 %v1116, 7
      %v1118 = vsub.s32 3, %v1117
      %v1119 = vrot.slane %v816, %v1118
      %v1120 = vlaneseq
      %v1121 = vshrl.u32 %v1120, 7
      %v1122 = vsub.s32 3, %v1121
      %v1123 = vrot.slane %v817, %v1122
      %v1124 = vlaneseq
      %v1125 = vshrl.u32 %v1124, 7
      %v1126 = vsub.s32 3, %v1125
      %v1127 = vrot.slane %v818, %v1126
      %v1128 = vlaneseq
      %v1129 = vshrl.u32 %v1128, 7
      %v1130 = vsub.s32 3, %v1129
      %v1131 = vrot.slane %v819, %v1130
      %v1132 = vmul.f32 %v1112, %v1119
      %v1133 = vmul.f32 %v1108, %v1123
      %v1134 = vmul.f32 %v1104, %v1127
      %v1135 = vmul.f32 %v1100, %v1131
      %v1136 = vmul.f32 %v1113, %v1119
      %v1137 = vmul.f32 %v1109, %v1123
      %v1138 = vmul.f32 %v1105, %v1127
      %v1139 = vmul.f32 %v1101, %v1131
      %v1140 = vmul.f32 %v1114, %v1119
      %v1141 = vmul.f32 %v1110, %v1123
      %v1142 = vmul.f32 %v1106, %v1127
      %v1143 = vmul.f32 %v1102, %v1131
      %v1144 = vmul.f32 %v1115, %v1119
      %v1145 = vmul.f32 %v1111, %v1123
      %v1146 = vmul.f32 %v1107, %v1127
      %v1147 = vmul.f32 %v1103, %v1131
      %v1148 = vadd.f32 %v1052, %v1132
      %v1149 = vadd.f32 %v1053, %v1133
      %v1150 = vadd.f32 %v1054, %v1134
      %v1151 = vadd.f32 %v1055, %v1135
      %v1152 = vadd.f32 %v1056, %v1136
      %v1153 = vadd.f32 %v1057, %v1137
      %v1154 = vadd.f32 %v1058, %v1138
      %v1155 = vadd.f32 %v1059, %v1139
      %v1156 = vadd.f32 %v1060, %v1140
      %v1157 = vadd.f32 %v1061, %v1141
      %v1158 = vadd.f32 %v1062, %v1142
      %v1159 = vadd.f32 %v1063, %v1143
      %v1160 = vadd.f32 %v1064, %v1144
      %v1161 = vadd.f32 %v1065, %v1145
      %v1162 = vadd.f32 %v1066, %v1146
      %v1163 = vadd.f32 %v1067, %v1147
      %v1164 = vlaneseq
      %v1165 = vshrl.u32 %v1164, 7
      %v1166 = vsub.s32 4, %v1165
      %v1167 = vrot.slane %v816, %v1166
      %v1168 = vlaneseq
      %v1169 = vshrl.u32 %v1168, 7
      %v1170 = vsub.s32 4, %v1169
      %v1171 = vrot.slane %v817, %v1170
      %v1172 = vlaneseq
      %v1173 = vshrl.u32 %v1172, 7
      %v1174 = vsub.s32 4, %v1173
      %v1175 = vrot.slane %v818, %v1174
      %v1176 = vlaneseq
      %v1177 = vshrl.u32 %v1176, 7
      %v1178 = vsub.s32 4, %v1177
      %v1179 = vrot.slane %v819, %v1178
      %v1180 = vmul.f32 %v625, %v1167
      %v1181 = vmul.f32 %v626, %v1171
      %v1182 = vmul.f32 %v627, %v1175
      %v1183 = vmul.f32 %v628, %v1179
      %v1184 = vmul.f32 %v629, %v1167
      %v1185 = vmul.f32 %v630, %v1171
      %v1186 = vmul.f32 %v631, %v1175
      %v1187 = vmul.f32 %v632, %v1179
      %v1188 = vmul.f32 %v633, %v1167
      %v1189 = vmul.f32 %v634, %v1171
      %v1190 = vmul.f32 %v635, %v1175
      %v1191 = vmul.f32 %v636, %v1179
      %v1192 = vmul.f32 %v637, %v1167
      %v1193 = vmul.f32 %v638, %v1171
      %v1194 = vmul.f32 %v639, %v1175
      %v1195 = vmul.f32 %v640, %v1179
      %v1196 = vadd.f32 %v1148, %v1180
      %v1197 = vadd.f32 %v1149, %v1181
      %v1198 = vadd.f32 %v1150, %v1182
      %v1199 = vadd.f32 %v1151, %v1183
      %v1200 = vadd.f32 %v1152, %v1184
      %v1201 = vadd.f32 %v1153, %v1185
      %v1202 = vadd.f32 %v1154, %v1186
      %v1203 = vadd.f32 %v1155, %v1187
      %v1204 = vadd.f32 %v1156, %v1188
      %v1205 = vadd.f32 %v1157, %v1189
      %v1206 = vadd.f32 %v1158, %v1190
      %v1207 = vadd.f32 %v1159, %v1191
      %v1208 = vadd.f32 %v1160, %v1192
      %v1209 = vadd.f32 %v1161, %v1193
      %v1210 = vadd.f32 %v1162, %v1194
      %v1211 = vadd.f32 %v1163, %v1195
      %1212 = vrot.lane.b32.xlu0 %v625, 96
      %v1213 = vpop.permute.xlu0 %1212
      %1214 = vrot.lane.b32.xlu0 %v629, 96
      %v1215 = vpop.permute.xlu0 %1214
      %1216 = vrot.lane.b32.xlu0 %v633, 96
      %v1217 = vpop.permute.xlu0 %1216
      %1218 = vrot.lane.b32.xlu0 %v637, 96
      %v1219 = vpop.permute.xlu0 %1218
      %1220 = vrot.lane.b32.xlu0 %v626, 96
      %v1221 = vpop.permute.xlu0 %1220
      %1222 = vrot.lane.b32.xlu0 %v630, 96
      %v1223 = vpop.permute.xlu0 %1222
      %1224 = vrot.lane.b32.xlu0 %v634, 96
      %v1225 = vpop.permute.xlu0 %1224
      %1226 = vrot.lane.b32.xlu0 %v638, 96
      %v1227 = vpop.permute.xlu0 %1226
      %1228 = vrot.lane.b32.xlu0 %v627, 96
      %v1229 = vpop.permute.xlu0 %1228
      %1230 = vrot.lane.b32.xlu0 %v631, 96
      %v1231 = vpop.permute.xlu0 %1230
      %1232 = vrot.lane.b32.xlu0 %v635, 96
      %v1233 = vpop.permute.xlu0 %1232
      %1234 = vrot.lane.b32.xlu0 %v639, 96
      %v1235 = vpop.permute.xlu0 %1234
      %1236 = vrot.lane.b32.xlu0 %v628, 96
      %v1237 = vpop.permute.xlu0 %1236
      %1238 = vrot.lane.b32.xlu0 %v632, 96
      %v1239 = vpop.permute.xlu0 %1238
      %1240 = vrot.lane.b32.xlu0 %v636, 96
      %v1241 = vpop.permute.xlu0 %1240
      %1242 = vrot.lane.b32.xlu0 %v640, 96
      %v1243 = vpop.permute.xlu0 %1242
      %v1244 = vsel %vm1003, %v1229, %v1237
      %v1245 = vsel %vm1003, %v1231, %v1239
      %v1246 = vsel %vm1003, %v1233, %v1241
      %v1247 = vsel %vm1003, %v1235, %v1243
      %v1248 = vsel %vm1003, %v1221, %v1229
      %v1249 = vsel %vm1003, %v1223, %v1231
      %v1250 = vsel %vm1003, %v1225, %v1233
      %v1251 = vsel %vm1003, %v1227, %v1235
      %v1252 = vsel %vm1003, %v1213, %v1221
      %v1253 = vsel %vm1003, %v1215, %v1223
      %v1254 = vsel %vm1003, %v1217, %v1225
      %v1255 = vsel %vm1003, %v1219, %v1227
      %v1256 = vsel %vm1003, %v1237, %v1213
      %v1257 = vsel %vm1003, %v1239, %v1215
      %v1258 = vsel %vm1003, %v1241, %v1217
      %v1259 = vsel %vm1003, %v1243, %v1219
      %v1260 = vlaneseq
      %v1261 = vshrl.u32 %v1260, 7
      %v1262 = vsub.s32 5, %v1261
      %v1263 = vrot.slane %v816, %v1262
      %v1264 = vlaneseq
      %v1265 = vshrl.u32 %v1264, 7
      %v1266 = vsub.s32 5, %v1265
      %v1267 = vrot.slane %v817, %v1266
      %v1268 = vlaneseq
      %v1269 = vshrl.u32 %v1268, 7
      %v1270 = vsub.s32 5, %v1269
      %v1271 = vrot.slane %v818, %v1270
      %v1272 = vlaneseq
      %v1273 = vshrl.u32 %v1272, 7
      %v1274 = vsub.s32 5, %v1273
      %v1275 = vrot.slane %v819, %v1274
      %v1276 = vmul.f32 %v1252, %v1263
      %v1277 = vmul.f32 %v1248, %v1267
      %v1278 = vmul.f32 %v1244, %v1271
      %v1279 = vmul.f32 %v1256, %v1275
      %v1280 = vmul.f32 %v1253, %v1263
      %v1281 = vmul.f32 %v1249, %v1267
      %v1282 = vmul.f32 %v1245, %v1271
      %v1283 = vmul.f32 %v1257, %v1275
      %v1284 = vmul.f32 %v1254, %v1263
      %v1285 = vmul.f32 %v1250, %v1267
      %v1286 = vmul.f32 %v1246, %v1271
      %v1287 = vmul.f32 %v1258, %v1275
      %v1288 = vmul.f32 %v1255, %v1263
      %v1289 = vmul.f32 %v1251, %v1267
      %v1290 = vmul.f32 %v1247, %v1271
      %v1291 = vmul.f32 %v1259, %v1275
      %v1292 = vadd.f32 %v1196, %v1276
      %v1293 = vadd.f32 %v1197, %v1277
      %v1294 = vadd.f32 %v1198, %v1278
      %v1295 = vadd.f32 %v1199, %v1279
      %v1296 = vadd.f32 %v1200, %v1280
      %v1297 = vadd.f32 %v1201, %v1281
      %v1298 = vadd.f32 %v1202, %v1282
      %v1299 = vadd.f32 %v1203, %v1283
      %v1300 = vadd.f32 %v1204, %v1284
      %v1301 = vadd.f32 %v1205, %v1285
      %v1302 = vadd.f32 %v1206, %v1286
      %v1303 = vadd.f32 %v1207, %v1287
      %v1304 = vadd.f32 %v1208, %v1288
      %v1305 = vadd.f32 %v1209, %v1289
      %v1306 = vadd.f32 %v1210, %v1290
      %v1307 = vadd.f32 %v1211, %v1291
      %1308 = vrot.lane.b32.xlu0 %v800, 32
      %v1309 = vpop.permute.xlu0 %1308
      %1310 = vrot.lane.b32.xlu0 %v804, 32
      %v1311 = vpop.permute.xlu0 %1310
      %1312 = vrot.lane.b32.xlu0 %v808, 32
      %v1313 = vpop.permute.xlu0 %1312
      %1314 = vrot.lane.b32.xlu0 %v812, 32
      %v1315 = vpop.permute.xlu0 %1314
      %1316 = vrot.lane.b32.xlu0 %v801, 32
      %v1317 = vpop.permute.xlu0 %1316
      %1318 = vrot.lane.b32.xlu0 %v805, 32
      %v1319 = vpop.permute.xlu0 %1318
      %1320 = vrot.lane.b32.xlu0 %v809, 32
      %v1321 = vpop.permute.xlu0 %1320
      %1322 = vrot.lane.b32.xlu0 %v813, 32
      %v1323 = vpop.permute.xlu0 %1322
      %1324 = vrot.lane.b32.xlu0 %v802, 32
      %v1325 = vpop.permute.xlu0 %1324
      %1326 = vrot.lane.b32.xlu0 %v806, 32
      %v1327 = vpop.permute.xlu0 %1326
      %1328 = vrot.lane.b32.xlu0 %v810, 32
      %v1329 = vpop.permute.xlu0 %1328
      %1330 = vrot.lane.b32.xlu0 %v814, 32
      %v1331 = vpop.permute.xlu0 %1330
      %1332 = vrot.lane.b32.xlu0 %v803, 32
      %v1333 = vpop.permute.xlu0 %1332
      %1334 = vrot.lane.b32.xlu0 %v807, 32
      %v1335 = vpop.permute.xlu0 %1334
      %1336 = vrot.lane.b32.xlu0 %v811, 32
      %v1337 = vpop.permute.xlu0 %1336
      %1338 = vrot.lane.b32.xlu0 %v815, 32
      %v1339 = vpop.permute.xlu0 %1338
      %v1340 = vsel %vm858, %v1325, %v1333
      %v1341 = vsel %vm858, %v1327, %v1335
      %v1342 = vsel %vm858, %v1329, %v1337
      %v1343 = vsel %vm858, %v1331, %v1339
      %v1344 = vsel %vm858, %v1317, %v1325
      %v1345 = vsel %vm858, %v1319, %v1327
      %v1346 = vsel %vm858, %v1321, %v1329
      %v1347 = vsel %vm858, %v1323, %v1331
      %v1348 = vsel %vm858, %v1309, %v1317
      %v1349 = vsel %vm858, %v1311, %v1319
      %v1350 = vsel %vm858, %v1313, %v1321
      %v1351 = vsel %vm858, %v1315, %v1323
      %v1352 = vsel %vm858, %v1333, %v1309
      %v1353 = vsel %vm858, %v1335, %v1311
      %v1354 = vsel %vm858, %v1337, %v1313
      %v1355 = vsel %vm858, %v1339, %v1315
      %v1356 = vlaneseq
      %v1357 = vshrl.u32 %v1356, 7
      %v1358 = vsub.s32 6, %v1357
      %v1359 = vrot.slane %v816, %v1358
      %v1360 = vlaneseq
      %v1361 = vshrl.u32 %v1360, 7
      %v1362 = vsub.s32 6, %v1361
      %v1363 = vrot.slane %v817, %v1362
      %v1364 = vlaneseq
      %v1365 = vshrl.u32 %v1364, 7
      %v1366 = vsub.s32 6, %v1365
      %v1367 = vrot.slane %v818, %v1366
      %v1368 = vlaneseq
      %v1369 = vshrl.u32 %v1368, 7
      %v1370 = vsub.s32 6, %v1369
      %v1371 = vrot.slane %v819, %v1370
      %v1372 = vmul.f32 %v1352, %v1359
      %v1373 = vmul.f32 %v1348, %v1363
      %v1374 = vmul.f32 %v1344, %v1367
      %v1375 = vmul.f32 %v1340, %v1371
      %v1376 = vmul.f32 %v1353, %v1359
      %v1377 = vmul.f32 %v1349, %v1363
      %v1378 = vmul.f32 %v1345, %v1367
      %v1379 = vmul.f32 %v1341, %v1371
      %v1380 = vmul.f32 %v1354, %v1359
      %v1381 = vmul.f32 %v1350, %v1363
      %v1382 = vmul.f32 %v1346, %v1367
      %v1383 = vmul.f32 %v1342, %v1371
      %v1384 = vmul.f32 %v1355, %v1359
      %v1385 = vmul.f32 %v1351, %v1363
      %v1386 = vmul.f32 %v1347, %v1367
      %v1387 = vmul.f32 %v1343, %v1371
      %v1388 = vadd.f32 %v1292, %v1372
      %v1389 = vadd.f32 %v1293, %v1373
      %v1390 = vadd.f32 %v1294, %v1374
      %v1391 = vadd.f32 %v1295, %v1375
      %v1392 = vadd.f32 %v1296, %v1376
      %v1393 = vadd.f32 %v1297, %v1377
      %v1394 = vadd.f32 %v1298, %v1378
      %v1395 = vadd.f32 %v1299, %v1379
      %v1396 = vadd.f32 %v1300, %v1380
      %v1397 = vadd.f32 %v1301, %v1381
      %v1398 = vadd.f32 %v1302, %v1382
      %v1399 = vadd.f32 %v1303, %v1383
      %v1400 = vadd.f32 %v1304, %v1384
      %v1401 = vadd.f32 %v1305, %v1385
      %v1402 = vadd.f32 %v1306, %v1386
      %v1403 = vadd.f32 %v1307, %v1387
      %v1404 = vlaneseq
      %v1405 = vshrl.u32 %v1404, 7
      %v1406 = vsub.s32 7, %v1405
      %v1407 = vrot.slane %v816, %v1406
      %v1408 = vlaneseq
      %v1409 = vshrl.u32 %v1408, 7
      %v1410 = vsub.s32 7, %v1409
      %v1411 = vrot.slane %v817, %v1410
      %v1412 = vlaneseq
      %v1413 = vshrl.u32 %v1412, 7
      %v1414 = vsub.s32 7, %v1413
      %v1415 = vrot.slane %v818, %v1414
      %v1416 = vlaneseq
      %v1417 = vshrl.u32 %v1416, 7
      %v1418 = vsub.s32 7, %v1417
      %v1419 = vrot.slane %v819, %v1418
      %v1420 = vmul.f32 %v800, %v1407
      %v1421 = vmul.f32 %v801, %v1411
      %v1422 = vmul.f32 %v802, %v1415
      %v1423 = vmul.f32 %v803, %v1419
      %v1424 = vmul.f32 %v804, %v1407
      %v1425 = vmul.f32 %v805, %v1411
      %v1426 = vmul.f32 %v806, %v1415
      %v1427 = vmul.f32 %v807, %v1419
      %v1428 = vmul.f32 %v808, %v1407
      %v1429 = vmul.f32 %v809, %v1411
      %v1430 = vmul.f32 %v810, %v1415
      %v1431 = vmul.f32 %v811, %v1419
      %v1432 = vmul.f32 %v812, %v1407
      %v1433 = vmul.f32 %v813, %v1411
      %v1434 = vmul.f32 %v814, %v1415
      %v1435 = vmul.f32 %v815, %v1419
      %v1436 = vadd.f32 %v1388, %v1420
      %v1437 = vadd.f32 %v1389, %v1421
      %v1438 = vadd.f32 %v1390, %v1422
      %v1439 = vadd.f32 %v1391, %v1423
      %v1440 = vadd.f32 %v1392, %v1424
      %v1441 = vadd.f32 %v1393, %v1425
      %v1442 = vadd.f32 %v1394, %v1426
      %v1443 = vadd.f32 %v1395, %v1427
      %v1444 = vadd.f32 %v1396, %v1428
      %v1445 = vadd.f32 %v1397, %v1429
      %v1446 = vadd.f32 %v1398, %v1430
      %v1447 = vadd.f32 %v1399, %v1431
      %v1448 = vadd.f32 %v1400, %v1432
      %v1449 = vadd.f32 %v1401, %v1433
      %v1450 = vadd.f32 %v1402, %v1434
      %v1451 = vadd.f32 %v1403, %v1435
      %1452 = vrot.lane.b32.xlu0 %v800, 96
      %v1453 = vpop.permute.xlu0 %1452
      %1454 = vrot.lane.b32.xlu0 %v804, 96
      %v1455 = vpop.permute.xlu0 %1454
      %1456 = vrot.lane.b32.xlu0 %v808, 96
      %v1457 = vpop.permute.xlu0 %1456
      %1458 = vrot.lane.b32.xlu0 %v812, 96
      %v1459 = vpop.permute.xlu0 %1458
      %1460 = vrot.lane.b32.xlu0 %v801, 96
      %v1461 = vpop.permute.xlu0 %1460
      %1462 = vrot.lane.b32.xlu0 %v805, 96
      %v1463 = vpop.permute.xlu0 %1462
      %1464 = vrot.lane.b32.xlu0 %v809, 96
      %v1465 = vpop.permute.xlu0 %1464
      %1466 = vrot.lane.b32.xlu0 %v813, 96
      %v1467 = vpop.permute.xlu0 %1466
      %1468 = vrot.lane.b32.xlu0 %v802, 96
      %v1469 = vpop.permute.xlu0 %1468
      %1470 = vrot.lane.b32.xlu0 %v806, 96
      %v1471 = vpop.permute.xlu0 %1470
      %1472 = vrot.lane.b32.xlu0 %v810, 96
      %v1473 = vpop.permute.xlu0 %1472
      %1474 = vrot.lane.b32.xlu0 %v814, 96
      %v1475 = vpop.permute.xlu0 %1474
      %1476 = vrot.lane.b32.xlu0 %v803, 96
      %v1477 = vpop.permute.xlu0 %1476
      %1478 = vrot.lane.b32.xlu0 %v807, 96
      %v1479 = vpop.permute.xlu0 %1478
      %1480 = vrot.lane.b32.xlu0 %v811, 96
      %v1481 = vpop.permute.xlu0 %1480
      %1482 = vrot.lane.b32.xlu0 %v815, 96
      %v1483 = vpop.permute.xlu0 %1482
      %v1484 = vsel %vm1003, %v1469, %v1477
      %v1485 = vsel %vm1003, %v1471, %v1479
      %v1486 = vsel %vm1003, %v1473, %v1481
      %v1487 = vsel %vm1003, %v1475, %v1483
      %v1488 = vsel %vm1003, %v1461, %v1469
      %v1489 = vsel %vm1003, %v1463, %v1471
      %v1490 = vsel %vm1003, %v1465, %v1473
      %v1491 = vsel %vm1003, %v1467, %v1475
      %v1492 = vsel %vm1003, %v1453, %v1461
      %v1493 = vsel %vm1003, %v1455, %v1463
      %v1494 = vsel %vm1003, %v1457, %v1465
      %v1495 = vsel %vm1003, %v1459, %v1467
      %v1496 = vsel %vm1003, %v1477, %v1453
      %v1497 = vsel %vm1003, %v1479, %v1455
      %v1498 = vsel %vm1003, %v1481, %v1457
      %v1499 = vsel %vm1003, %v1483, %v1459
      %v1500 = vlaneseq
      %v1501 = vshrl.u32 %v1500, 7
      %v1502 = vsub.s32 0, %v1501
      %v1503 = vrot.slane %v820, %v1502
      %v1504 = vlaneseq
      %v1505 = vshrl.u32 %v1504, 7
      %v1506 = vsub.s32 0, %v1505
      %v1507 = vrot.slane %v821, %v1506
      %v1508 = vlaneseq
      %v1509 = vshrl.u32 %v1508, 7
      %v1510 = vsub.s32 0, %v1509
      %v1511 = vrot.slane %v822, %v1510
      %v1512 = vlaneseq
      %v1513 = vshrl.u32 %v1512, 7
      %v1514 = vsub.s32 0, %v1513
      %v1515 = vrot.slane %v823, %v1514
      %v1516 = vmul.f32 %v1492, %v1503
      %v1517 = vmul.f32 %v1488, %v1507
      %v1518 = vmul.f32 %v1484, %v1511
      %v1519 = vmul.f32 %v1496, %v1515
      %v1520 = vmul.f32 %v1493, %v1503
      %v1521 = vmul.f32 %v1489, %v1507
      %v1522 = vmul.f32 %v1485, %v1511
      %v1523 = vmul.f32 %v1497, %v1515
      %v1524 = vmul.f32 %v1494, %v1503
      %v1525 = vmul.f32 %v1490, %v1507
      %v1526 = vmul.f32 %v1486, %v1511
      %v1527 = vmul.f32 %v1498, %v1515
      %v1528 = vmul.f32 %v1495, %v1503
      %v1529 = vmul.f32 %v1491, %v1507
      %v1530 = vmul.f32 %v1487, %v1511
      %v1531 = vmul.f32 %v1499, %v1515
      %v1532 = vadd.f32 %v1436, %v1516
      %v1533 = vadd.f32 %v1437, %v1517
      %v1534 = vadd.f32 %v1438, %v1518
      %v1535 = vadd.f32 %v1439, %v1519
      %v1536 = vadd.f32 %v1440, %v1520
      %v1537 = vadd.f32 %v1441, %v1521
      %v1538 = vadd.f32 %v1442, %v1522
      %v1539 = vadd.f32 %v1443, %v1523
      %v1540 = vadd.f32 %v1444, %v1524
      %v1541 = vadd.f32 %v1445, %v1525
      %v1542 = vadd.f32 %v1446, %v1526
      %v1543 = vadd.f32 %v1447, %v1527
      %v1544 = vadd.f32 %v1448, %v1528
      %v1545 = vadd.f32 %v1449, %v1529
      %v1546 = vadd.f32 %v1450, %v1530
      %v1547 = vadd.f32 %v1451, %v1531
      %v1548 = vld [vmem:[%s4] sm:$0xf]
      %v1550 = vlaneseq
      %v1551 = vshrl.u32 %v1550, 7
      %v1552 = vsub.s32 0, %v1551
      %v1553 = vrot.slane %v1548, %v1552
      %v1554 = vlaneseq
      %v1555 = vshrl.u32 %v1554, 7
      %v1556 = vsub.s32 1, %v1555
      %v1557 = vrot.slane %v1548, %v1556
      %v1558 = vlaneseq
      %v1559 = vshrl.u32 %v1558, 7
      %v1560 = vsub.s32 2, %v1559
      %v1561 = vrot.slane %v1548, %v1560
      %v1562 = vlaneseq
      %v1563 = vshrl.u32 %v1562, 7
      %v1564 = vsub.s32 3, %v1563
      %v1565 = vrot.slane %v1548, %v1564
      %v1570 = vadd.f32 %v1532, %v1553
      %v1571 = vadd.f32 %v1533, %v1557
      %v1572 = vadd.f32 %v1534, %v1561
      %v1573 = vadd.f32 %v1535, %v1565
      %v1574 = vadd.f32 %v1536, %v1553
      %v1575 = vadd.f32 %v1537, %v1557
      %v1576 = vadd.f32 %v1538, %v1561
      %v1577 = vadd.f32 %v1539, %v1565
      %v1578 = vadd.f32 %v1540, %v1553
      %v1579 = vadd.f32 %v1541, %v1557
      %v1580 = vadd.f32 %v1542, %v1561
      %v1581 = vadd.f32 %v1543, %v1565
      %v1582 = vadd.f32 %v1544, %v1553
      %v1583 = vadd.f32 %v1545, %v1557
      %v1584 = vadd.f32 %v1546, %v1561
      %v1585 = vadd.f32 %v1547, %v1565
      %v1586 = vmax.f32 %v1570, 0.0
      %v1587 = vmax.f32 %v1571, 0.0
      %v1588 = vmax.f32 %v1572, 0.0
      %v1589 = vmax.f32 %v1573, 0.0
      %v1590 = vmax.f32 %v1574, 0.0
      %v1591 = vmax.f32 %v1575, 0.0
      %v1592 = vmax.f32 %v1576, 0.0
      %v1593 = vmax.f32 %v1577, 0.0
      %v1594 = vmax.f32 %v1578, 0.0
      %v1595 = vmax.f32 %v1579, 0.0
      %v1596 = vmax.f32 %v1580, 0.0
      %v1597 = vmax.f32 %v1581, 0.0
      %v1598 = vmax.f32 %v1582, 0.0
      %v1599 = vmax.f32 %v1583, 0.0
      %v1600 = vmax.f32 %v1584, 0.0
      %v1601 = vmax.f32 %v1585, 0.0
      %v1602 = vmin.f32 %v1586, 6.0
      %v1603 = vmin.f32 %v1587, 6.0
      %v1604 = vmin.f32 %v1588, 6.0
      %v1605 = vmin.f32 %v1589, 6.0
      %v1606 = vmin.f32 %v1590, 6.0
      %v1607 = vmin.f32 %v1591, 6.0
      %v1608 = vmin.f32 %v1592, 6.0
      %v1609 = vmin.f32 %v1593, 6.0
      %v1610 = vmin.f32 %v1594, 6.0
      %v1611 = vmin.f32 %v1595, 6.0
      %v1612 = vmin.f32 %v1596, 6.0
      %v1613 = vmin.f32 %v1597, 6.0
      %v1614 = vmin.f32 %v1598, 6.0
      %v1615 = vmin.f32 %v1599, 6.0
      %v1616 = vmin.f32 %v1600, 6.0
      %v1617 = vmin.f32 %v1601, 6.0
      %v1618 = vpack.c.bf16 %v1606, %v1602
      %v1619 = vpack.c.bf16 %v1607, %v1603
      %v1620 = vpack.c.bf16 %v1608, %v1604
      %v1621 = vpack.c.bf16 %v1609, %v1605
      %v1622 = vpack.c.bf16 %v1614, %v1610
      %v1623 = vpack.c.bf16 %v1615, %v1611
      %v1624 = vpack.c.bf16 %v1616, %v1612
      %v1625 = vpack.c.bf16 %v1617, %v1613
      %v1626 = vld [vmem:[%s5] sm:$0xf]
      %v1627 = vld [vmem:[%s5 + $0x4] sm:$0xf]
      %v1628 = vld [vmem:[%s5 + $0x8] sm:$0xf]
      %v1629 = vld [vmem:[%s5 + $0xc] sm:$0xf]
      %v1630 = vld [vmem:[%s5 + $0x10] sm:$0xf]
      %v1631 = vld [vmem:[%s5 + $0x14] sm:$0xf]
      %v1632 = vld [vmem:[%s5 + $0x18] sm:$0xf]
      %v1633 = vld [vmem:[%s5 + $0x1c] sm:$0xf]
      %v1634 = vld [vmem:[%s5 + $0x20] sm:$0xf]
      %v1635 = vld [vmem:[%s5 + $0x24] sm:$0xf]
      %v1636 = vld [vmem:[%s5 + $0x28] sm:$0xf]
      %v1637 = vld [vmem:[%s5 + $0x2c] sm:$0xf]
      %v1638 = vld [vmem:[%s5 + $0x30] sm:$0xf]
      %v1639 = vld [vmem:[%s5 + $0x34] sm:$0xf]
      %v1640 = vld [vmem:[%s5 + $0x38] sm:$0xf]
      %v1641 = vld [vmem:[%s5 + $0x3c] sm:$0xf]
      %v1642 = vld [vmem:[%s5 + $0x40] sm:$0xf]
      %v1643 = vld [vmem:[%s5 + $0x44] sm:$0xf]
      %v1644 = vld [vmem:[%s5 + $0x48] sm:$0xf]
      %v1645 = vld [vmem:[%s5 + $0x4c] sm:$0xf]
      %v1646 = vld [vmem:[%s5 + $0x50] sm:$0xf]
      %v1647 = vld [vmem:[%s5 + $0x54] sm:$0xf]
      %v1648 = vld [vmem:[%s5 + $0x58] sm:$0xf]
      %v1649 = vld [vmem:[%s5 + $0x5c] sm:$0xf]
      %v1650 = vld [vmem:[%s5 + $0x60] sm:$0xf]
      %v1651 = vld [vmem:[%s5 + $0x64] sm:$0xf]
      %v1652 = vld [vmem:[%s5 + $0x68] sm:$0xf]
      %v1653 = vld [vmem:[%s5 + $0x6c] sm:$0xf]
      %v1654 = vld [vmem:[%s5 + $0x70] sm:$0xf]
      %v1655 = vld [vmem:[%s5 + $0x74] sm:$0xf]
      %v1656 = vld [vmem:[%s5 + $0x78] sm:$0xf]
      %v1657 = vld [vmem:[%s5 + $0x7c] sm:$0xf]
      %v1658 = vld [vmem:[%s5 + $0x80] sm:$0xf]
      %v1659 = vld [vmem:[%s5 + $0x84] sm:$0xf]
      %v1660 = vld [vmem:[%s5 + $0x88] sm:$0xf]
      %v1661 = vld [vmem:[%s5 + $0x8c] sm:$0xf]
      %v1662 = vld [vmem:[%s5 + $0x90] sm:$0xf]
      %v1663 = vld [vmem:[%s5 + $0x94] sm:$0xf]
      %v1664 = vld [vmem:[%s5 + $0x98] sm:$0xf]
      %v1665 = vld [vmem:[%s5 + $0x9c] sm:$0xf]
      %v1666 = vld [vmem:[%s5 + $0xa0] sm:$0xf]
      %v1667 = vld [vmem:[%s5 + $0xa4] sm:$0xf]
      %v1668 = vld [vmem:[%s5 + $0xa8] sm:$0xf]
      %v1669 = vld [vmem:[%s5 + $0xac] sm:$0xf]
      %v1670 = vld [vmem:[%s5 + $0xb0] sm:$0xf]
      %v1671 = vld [vmem:[%s5 + $0xb4] sm:$0xf]
      %v1672 = vld [vmem:[%s5 + $0xb8] sm:$0xf]
      %v1673 = vld [vmem:[%s5 + $0xbc] sm:$0xf]
      %v1674 = vld [vmem:[%s5 + $0xc0] sm:$0xf]
      %v1675 = vld [vmem:[%s5 + $0xc4] sm:$0xf]
      %v1676 = vld [vmem:[%s5 + $0xc8] sm:$0xf]
      %v1677 = vld [vmem:[%s5 + $0xcc] sm:$0xf]
      %v1678 = vld [vmem:[%s5 + $0xd0] sm:$0xf]
      %v1679 = vld [vmem:[%s5 + $0xd4] sm:$0xf]
      %v1680 = vld [vmem:[%s5 + $0xd8] sm:$0xf]
      %v1681 = vld [vmem:[%s5 + $0xdc] sm:$0xf]
      %v1682 = vld [vmem:[%s5 + $0xe0] sm:$0xf]
      %v1683 = vld [vmem:[%s5 + $0xe4] sm:$0xf]
      %v1684 = vld [vmem:[%s5 + $0xe8] sm:$0xf]
      %v1685 = vld [vmem:[%s5 + $0xec] sm:$0xf]
      %v1686 = vld [vmem:[%s5 + $0xf0] sm:$0xf]
      %v1687 = vld [vmem:[%s5 + $0xf4] sm:$0xf]
      %v1688 = vld [vmem:[%s5 + $0xf8] sm:$0xf]
      %v1689 = vld [vmem:[%s5 + $0xfc] sm:$0xf]
      %v1690 = vld [vmem:[%s6] sm:$0x1]
      %v1692 = vlaneseq
      %v1693 = vshrl.u32 %v1692, 7
      %v1694 = vsub.s32 0, %v1693
      %v1695 = vrot.slane %v1690, %v1694
      %v1761 = vunpack.c.l.b16 %v1626
      %v1762 = vunpack.c.l.b16 %v1627
      %v1763 = vunpack.c.l.b16 %v1628
      %v1764 = vunpack.c.l.b16 %v1629
      %v1765 = vunpack.c.l.b16 %v1630
      %v1766 = vunpack.c.l.b16 %v1631
      %v1767 = vunpack.c.l.b16 %v1632
      %v1768 = vunpack.c.l.b16 %v1633
      %v1769 = vunpack.c.l.b16 %v1634
      %v1770 = vunpack.c.l.b16 %v1635
      %v1771 = vunpack.c.l.b16 %v1636
      %v1772 = vunpack.c.l.b16 %v1637
      %v1773 = vunpack.c.l.b16 %v1638
      %v1774 = vunpack.c.l.b16 %v1639
      %v1775 = vunpack.c.l.b16 %v1640
      %v1776 = vunpack.c.l.b16 %v1641
      %v1777 = vunpack.c.l.b16 %v1642
      %v1778 = vunpack.c.l.b16 %v1643
      %v1779 = vunpack.c.l.b16 %v1644
      %v1780 = vunpack.c.l.b16 %v1645
      %v1781 = vunpack.c.l.b16 %v1646
      %v1782 = vunpack.c.l.b16 %v1647
      %v1783 = vunpack.c.l.b16 %v1648
      %v1784 = vunpack.c.l.b16 %v1649
      %v1785 = vunpack.c.l.b16 %v1650
      %v1786 = vunpack.c.l.b16 %v1651
      %v1787 = vunpack.c.l.b16 %v1652
      %v1788 = vunpack.c.l.b16 %v1653
      %v1789 = vunpack.c.l.b16 %v1654
      %v1790 = vunpack.c.l.b16 %v1655
      %v1791 = vunpack.c.l.b16 %v1656
      %v1792 = vunpack.c.l.b16 %v1657
      %v1793 = vunpack.c.l.b16 %v1658
      %v1794 = vunpack.c.l.b16 %v1659
      %v1795 = vunpack.c.l.b16 %v1660
      %v1796 = vunpack.c.l.b16 %v1661
      %v1797 = vunpack.c.l.b16 %v1662
      %v1798 = vunpack.c.l.b16 %v1663
      %v1799 = vunpack.c.l.b16 %v1664
      %v1800 = vunpack.c.l.b16 %v1665
      %v1801 = vunpack.c.l.b16 %v1666
      %v1802 = vunpack.c.l.b16 %v1667
      %v1803 = vunpack.c.l.b16 %v1668
      %v1804 = vunpack.c.l.b16 %v1669
      %v1805 = vunpack.c.l.b16 %v1670
      %v1806 = vunpack.c.l.b16 %v1671
      %v1807 = vunpack.c.l.b16 %v1672
      %v1808 = vunpack.c.l.b16 %v1673
      %v1809 = vunpack.c.l.b16 %v1674
      %v1810 = vunpack.c.l.b16 %v1675
      %v1811 = vunpack.c.l.b16 %v1676
      %v1812 = vunpack.c.l.b16 %v1677
      %v1813 = vunpack.c.l.b16 %v1678
      %v1814 = vunpack.c.l.b16 %v1679
      %v1815 = vunpack.c.l.b16 %v1680
      %v1816 = vunpack.c.l.b16 %v1681
      %v1817 = vunpack.c.l.b16 %v1682
      %v1818 = vunpack.c.l.b16 %v1683
      %v1819 = vunpack.c.l.b16 %v1684
      %v1820 = vunpack.c.l.b16 %v1685
      %v1821 = vunpack.c.l.b16 %v1686
      %v1822 = vunpack.c.l.b16 %v1687
      %v1823 = vunpack.c.l.b16 %v1688
      %v1824 = vunpack.c.l.b16 %v1689
      %v1825 = vpack.c.b16 %v1762, %v1761
      %v1826 = vpack.c.b16 %v1764, %v1763
      %v1827 = vpack.c.b16 %v1766, %v1765
      %v1828 = vpack.c.b16 %v1768, %v1767
      %v1829 = vpack.c.b16 %v1770, %v1769
      %v1830 = vpack.c.b16 %v1772, %v1771
      %v1831 = vpack.c.b16 %v1774, %v1773
      %v1832 = vpack.c.b16 %v1776, %v1775
      %v1833 = vpack.c.b16 %v1778, %v1777
      %v1834 = vpack.c.b16 %v1780, %v1779
      %v1835 = vpack.c.b16 %v1782, %v1781
      %v1836 = vpack.c.b16 %v1784, %v1783
      %v1837 = vpack.c.b16 %v1786, %v1785
      %v1838 = vpack.c.b16 %v1788, %v1787
      %v1839 = vpack.c.b16 %v1790, %v1789
      %v1840 = vpack.c.b16 %v1792, %v1791
      %v1841 = vpack.c.b16 %v1794, %v1793
      %v1842 = vpack.c.b16 %v1796, %v1795
      %v1843 = vpack.c.b16 %v1798, %v1797
      %v1844 = vpack.c.b16 %v1800, %v1799
      %v1845 = vpack.c.b16 %v1802, %v1801
      %v1846 = vpack.c.b16 %v1804, %v1803
      %v1847 = vpack.c.b16 %v1806, %v1805
      %v1848 = vpack.c.b16 %v1808, %v1807
      %v1849 = vpack.c.b16 %v1810, %v1809
      %v1850 = vpack.c.b16 %v1812, %v1811
      %v1851 = vpack.c.b16 %v1814, %v1813
      %v1852 = vpack.c.b16 %v1816, %v1815
      %v1853 = vpack.c.b16 %v1818, %v1817
      %v1854 = vpack.c.b16 %v1820, %v1819
      %v1855 = vpack.c.b16 %v1822, %v1821
      %v1856 = vpack.c.b16 %v1824, %v1823
      %1889 = vmatprep.subr.bf16.mxu0 0
      %1890 = vmatpush1.bf16.msra.mxu0 %v1825
      %1891 = vmatprep.subr.bf16.mxu0 0
      %1892 = vmatpush1.bf16.msra.mxu0 %v1826
      %1893 = vmatprep.subr.bf16.mxu0 0
      %1894 = vmatpush1.bf16.msra.mxu0 %v1827
      %1895 = vmatprep.subr.bf16.mxu0 0
      %1896 = vmatpush1.bf16.msra.mxu0 %v1828
      %1897 = vmatprep.subr.bf16.mxu0 0
      %1898 = vmatpush1.bf16.msra.mxu0 %v1829
      %1899 = vmatprep.subr.bf16.mxu0 0
      %1900 = vmatpush1.bf16.msra.mxu0 %v1830
      %1901 = vmatprep.subr.bf16.mxu0 0
      %1902 = vmatpush1.bf16.msra.mxu0 %v1831
      %1903 = vmatprep.subr.bf16.mxu0 0
      %1904 = vmatpush1.bf16.msra.mxu0 %v1832
      %1905 = vmatprep.subr.bf16.mxu0 0
      %1906 = vmatpush1.bf16.msra.mxu0 %v1833
      %1907 = vmatprep.subr.bf16.mxu0 0
      %1908 = vmatpush1.bf16.msra.mxu0 %v1834
      %1909 = vmatprep.subr.bf16.mxu0 0
      %1910 = vmatpush1.bf16.msra.mxu0 %v1835
      %1911 = vmatprep.subr.bf16.mxu0 0
      %1912 = vmatpush1.bf16.msra.mxu0 %v1836
      %1913 = vmatprep.subr.bf16.mxu0 0
      %1914 = vmatpush1.bf16.msra.mxu0 %v1837
      %1915 = vmatprep.subr.bf16.mxu0 0
      %1916 = vmatpush1.bf16.msra.mxu0 %v1838
      %1917 = vmatprep.subr.bf16.mxu0 0
      %1918 = vmatpush1.bf16.msra.mxu0 %v1839
      %1919 = vmatprep.subr.bf16.mxu0 0
      %1920 = vmatpush1.bf16.msra.mxu0 %v1840
      %1921 = vmatprep.mubr.bf16.mxu0 %v1619
      %1922 = vmatmul.mubr.bf16.gmra.mrb[0].mxu0 %v1618
      %v1923 = vpop.f32.mrb[0].mxu0
      %v1924 = vadd.f32 %v1695, %v1923
      %v1925 = vpop.f32.mrb[0].mxu0
      %v1926 = vpop.f32.mrb[0].mxu0
      %v1927 = vadd.f32 %v1695, %v1926
      %v1928 = vpop.f32.mrb[0].mxu0
      %1929 = vmatprep.mubr.bf16.mxu0 %v1623
      %1930 = vmatmul.mubr.bf16.gmra.mrb[0].mxu0 %v1622
      %v1931 = vpop.f32.mrb[0].mxu0
      %v1932 = vadd.f32 %v1695, %v1931
      %v1933 = vpop.f32.mrb[0].mxu0
      %v1934 = vpop.f32.mrb[0].mxu0
      %v1935 = vadd.f32 %v1695, %v1934
      %v1936 = vpop.f32.mrb[0].mxu0
      %1937 = vdwg.mxu0
      %1938 = vmatprep.subr.bf16.mxu0 0
      %1939 = vmatpush1.bf16.msra.mxu0 %v1841
      %1940 = vmatprep.subr.bf16.mxu0 0
      %1941 = vmatpush1.bf16.msra.mxu0 %v1842
      %1942 = vmatprep.subr.bf16.mxu0 0
      %1943 = vmatpush1.bf16.msra.mxu0 %v1843
      %1944 = vmatprep.subr.bf16.mxu0 0
      %1945 = vmatpush1.bf16.msra.mxu0 %v1844
      %1946 = vmatprep.subr.bf16.mxu0 0
      %1947 = vmatpush1.bf16.msra.mxu0 %v1845
      %1948 = vmatprep.subr.bf16.mxu0 0
      %1949 = vmatpush1.bf16.msra.mxu0 %v1846
      %1950 = vmatprep.subr.bf16.mxu0 0
      %1951 = vmatpush1.bf16.msra.mxu0 %v1847
      %1952 = vmatprep.subr.bf16.mxu0 0
      %1953 = vmatpush1.bf16.msra.mxu0 %v1848
      %1954 = vmatprep.subr.bf16.mxu0 0
      %1955 = vmatpush1.bf16.msra.mxu0 %v1849
      %1956 = vmatprep.subr.bf16.mxu0 0
      %1957 = vmatpush1.bf16.msra.mxu0 %v1850
      %1958 = vmatprep.subr.bf16.mxu0 0
      %1959 = vmatpush1.bf16.msra.mxu0 %v1851
      %1960 = vmatprep.subr.bf16.mxu0 0
      %1961 = vmatpush1.bf16.msra.mxu0 %v1852
      %1962 = vmatprep.subr.bf16.mxu0 0
      %1963 = vmatpush1.bf16.msra.mxu0 %v1853
      %1964 = vmatprep.subr.bf16.mxu0 0
      %1965 = vmatpush1.bf16.msra.mxu0 %v1854
      %1966 = vmatprep.subr.bf16.mxu0 0
      %1967 = vmatpush1.bf16.msra.mxu0 %v1855
      %1968 = vmatprep.subr.bf16.mxu0 0
      %1969 = vmatpush1.bf16.msra.mxu0 %v1856
      %1970 = vmatprep.mubr.bf16.mxu0 %v1621
      %1971 = vmatmul.mubr.bf16.gmra.mrb[0].mxu0 %v1620
      %v1972 = vpop.f32.mrb[0].mxu0
      %v1973 = vadd.f32 %v1924, %v1972
      %v1974 = vpop.f32.mrb[0].mxu0
      %v1975 = vpop.f32.mrb[0].mxu0
      %v1976 = vadd.f32 %v1927, %v1975
      %v1977 = vpop.f32.mrb[0].mxu0
      %1978 = vmatprep.mubr.bf16.mxu0 %v1625
      %1979 = vmatmul.mubr.bf16.gmra.mrb[0].mxu0 %v1624
      %v1980 = vpop.f32.mrb[0].mxu0
      %v1981 = vadd.f32 %v1932, %v1980
      %v1982 = vpop.f32.mrb[0].mxu0
      %v1983 = vpop.f32.mrb[0].mxu0
      %v1984 = vadd.f32 %v1935, %v1983
      %v1985 = vpop.f32.mrb[0].mxu0
      %1986 = vdwg.mxu0
      %v1987 = vadd.f32 %v1973, %v283
      %v1988 = vadd.f32 %v1976, %v284
      %v1989 = vadd.f32 %v1981, %v285
      %v1990 = vadd.f32 %v1984, %v286
      %1991 = vst [vmem:[%s280] sm:$0xff] %v1987
      %1992 = vst [vmem:[%s280 + $0x8] sm:$0xff] %v1988
      %1993 = vst [vmem:[%s280 + $0x10] sm:$0xff] %v1989
      %1994 = vst [vmem:[%s280 + $0x18] sm:$0xff] %v1990
      %s1995 = smul.u32 4, %s18
      %p1996 = scmp.lt.s32.totalorder %s1995, 7
      %s1997 = scalar_select %p1996, %s1995, 7
      %s1998 = smul.addr %s1997, 8
      %s1999 = scalar_lea.vmem %s7, %s1998
      // Predicated region
      $region49: #{inverted_residual.1} parent=47 // pred_check
        %p2000 = pneg %p188
      $region50: #{inverted_residual.1} parent=47 // pred_check_branch
        %2002 = sbr.rel (%p2000) target = $region52
      $region51: #{inverted_residual.1} parent=47 // pred_region
        %s2003 = smul.u32 4, %s18
      $region52: #{inverted_residual.1} parent=47 // pred_fallthru
        _
    $region48: #{inverted_residual.1} parent=5 // pred_fallthru
      _
    %p2004 = scmp.le.s32.totalorder 2, %s13
    // Predicated region
    $region53: #{inverted_residual.1} parent=5 // pred_check
      %p2005 = pneg %p2004
    $region54: #{inverted_residual.1} parent=5 // pred_check_branch
      %2007 = sbr.rel (%p2005) target = $region56
    $region55: #{inverted_residual.1} parent=5 // pred_region
      %s2008 = ssub.s32 %s13, 2
      // Predicated region
      $region57: #{inverted_residual.1} parent=55 // pred_check
        %p2009 = pneg %p194
      $region58: #{inverted_residual.1} parent=55 // pred_check_branch
        %2011 = sbr.rel (%p2009) target = $region60
      $region59: #{inverted_residual.1} parent=55 // pred_region
        %s2012 = smul.u32 4, %s19
        %p2013 = scmp.lt.s32.totalorder %s2012, 7
        %s2014 = scalar_select %p2013, %s2012, 7
        %s2015 = smul.addr %s2014, 8
        %s2016 = scalar_lea.vmem %s7, %s2015
      $region60: #{inverted_residual.1} parent=55 // pred_fallthru
        _
    $region56: #{inverted_residual.1} parent=5 // pred_fallthru
      _
  $region6: #{inverted_residual.1} parent=0 // loop_footer
    %s17 = sadd.s32 1, %s13
  $region7: #{inverted_residual.1} parent=0 // loop_footer_branch
    %12 = sbr.rel target = $region3
  $region8: #{inverted_residual.1} parent=0 // loop_exit
    _

</llo_original>
